<compile_context>
chip_gen: v7x
topology: tpu7x:2x2x1
jax: 0.10.0
libtpu: 0.0.40
codegen_flags: <defaults>
</compile_context>

<pallas_src>
import functools
import numpy as np
import jax
import jax.numpy as jnp
from jax.experimental import pallas as pl
from jax.experimental.pallas import tpu as pltpu


def _round_up(x, m):
    return (x + m - 1) // m * m


@functools.lru_cache(maxsize=None)
def _vmem_limit():
    """Scoped-VMEM budget: ~3/4 of physical VMEM (128 MiB v5e/v6e, 64 MiB v7x), capped."""
    try:
        cap = int(pltpu.get_tpu_info().vmem_capacity_bytes)
    except Exception:
        cap = 64 * 1024 * 1024
    return min(cap * 3 // 4, 96 * 1024 * 1024)


# ---------------------------- Pallas kernels ----------------------------

def _dconv_kernel(xa_ref, xh_ref, w_ref, s_ref, b_ref, o_ref, *, KH, KW, Wp, L, relu):
    """Stride-1 conv: taps grouped along kw (KH dots with K = KW*Cin), activations
    sliced to L rows before the dot, folded-BN (+ReLU) fused on the VPU."""
    x = jnp.concatenate([xa_ref[...], xh_ref[...]], axis=0)     # (L + HALO*Wp, Cin) bf16
    acc = jnp.zeros((L, o_ref.shape[1]), jnp.float32)
    for kh in range(KH):
        base = kh * Wp
        if KW > 1:
            xk = jnp.concatenate([x[base + kw:base + kw + L] for kw in range(KW)], axis=1)
        else:
            xk = x[base:base + L]
        acc = acc + jnp.dot(xk, w_ref[kh], preferred_element_type=jnp.float32)
    y = acc * s_ref[...] + b_ref[...]
    if relu:
        y = jnp.maximum(y, 0.0)
    o_ref[...] = y.astype(o_ref.dtype)


def _dconv_res_kernel(xa_ref, xh_ref, w_ref, s_ref, b_ref, r_ref, o_ref, *, KH, KW, Wp, L):
    """Stride-1 conv (grouped taps) fused with folded-BN + residual add + ReLU."""
    x = jnp.concatenate([xa_ref[...], xh_ref[...]], axis=0)
    acc = jnp.zeros((L, o_ref.shape[1]), jnp.float32)
    for kh in range(KH):
        base = kh * Wp
        if KW > 1:
            xk = jnp.concatenate([x[base + kw:base + kw + L] for kw in range(KW)], axis=1)
        else:
            xk = x[base:base + L]
        acc = acc + jnp.dot(xk, w_ref[kh], preferred_element_type=jnp.float32)
    y = acc * s_ref[...] + b_ref[...] + r_ref[...].astype(jnp.float32)
    o_ref[...] = jnp.maximum(y, 0.0).astype(o_ref.dtype)


def _mm_bn_kernel(a_ref, w_ref, s_ref, b_ref, o_ref, *, relu):
    """Tiled matmul + folded-BN (+ReLU): strided-conv im2col and 1x1 stride-1 convs."""
    y = jnp.dot(a_ref[...], w_ref[...], preferred_element_type=jnp.float32)
    y = y * s_ref[...] + b_ref[...]
    if relu:
        y = jnp.maximum(y, 0.0)
    o_ref[...] = y.astype(o_ref.dtype)


def _mm_bn_res_kernel(a_ref, w_ref, s_ref, b_ref, r_ref, o_ref):
    """Tiled matmul + folded-BN + residual + ReLU (1x1 bottleneck conv3)."""
    y = jnp.dot(a_ref[...], w_ref[...], preferred_element_type=jnp.float32)
    y = y * s_ref[...] + b_ref[...] + r_ref[...].astype(jnp.float32)
    o_ref[...] = jnp.maximum(y, 0.0).astype(o_ref.dtype)


def _max3_kernel(a_ref, b_ref, c_ref, o_ref):
    o_ref[...] = jnp.maximum(jnp.maximum(a_ref[...], b_ref[...]), c_ref[...])


# -------------------------- stride-1 direct conv --------------------------

def _pick_row_tile(OH, Wp, Cin, TN, KW, has_res, nn):
    """Row-tile from a rough per-output-row VMEM model so blocks scale with chip VMEM."""
    row_bytes = 6 * Cin + 2 * KW * Cin + 16 * TN + (4 * TN if has_res else 0)
    budget = _vmem_limit() // 3
    toh = max(8, (budget // (row_bytes * Wp)) // 8 * 8)
    toh = min(toh, _round_up(OH, 8))
    # keep the grid >= 2 steps when possible so both v7x TensorCores get work
    if nn * pl.cdiv(OH, toh) < 2 <= OH // 8:
        toh = _round_up((OH + 1) // 2, 8)
    return toh


def _direct_conv(x, p, padding, relu=True, residual=None):
    """Stride-1 KxK conv + folded BN (+residual) (+ReLU). x:(H,W,Cin) bf16 NHWC."""
    H, W, Cin = x.shape
    KH = p['w'].shape[0]
    KW = p['w'].shape[1] // Cin
    Cout = p['w'].shape[-1]
    OH = H + 2 * padding - KH + 1
    OW = W + 2 * padding - KW + 1
    Wp = W + 2 * padding
    TN = min(Cout, 256)                       # 256-wide N tiles for the 2x256 MXU
    assert Cout % TN == 0
    nn = Cout // TN
    TOH = _pick_row_tile(OH, Wp, Cin, TN, KW, residual is not None, nn)
    nb = pl.cdiv(OH, TOH)
    L = TOH * Wp
    # minimal halo: >= (KH-1) image rows + (KW-1) cols, with sublane (x8) alignment
    HALO = 4 if (4 * Wp) % 8 == 0 else 8
    assert HALO * Wp >= (KH - 1) * Wp + (KW - 1) and TOH % HALO == 0 and L % 8 == 0
    hstep = TOH // HALO
    rows_ext = nb * TOH + HALO                # padded image rows incl. halo for last block

    xp = jnp.pad(x, ((padding, rows_ext - padding - H), (padding, padding), (0, 0)))
    xf = xp.reshape(rows_ext * Wp, Cin)       # flat (pixel, channel) view, row-major

    in_specs = [
        pl.BlockSpec((L, Cin), lambda i, j: (i, 0)),                        # row block
        pl.BlockSpec((HALO * Wp, Cin), lambda i, j: ((i + 1) * hstep, 0)),  # halo rows
        pl.BlockSpec((KH, KW * Cin, TN), lambda i, j: (0, 0, j)),           # grouped-tap weights
        pl.BlockSpec((1, TN), lambda i, j: (0, j)),                         # folded-BN scale
        pl.BlockSpec((1, TN), lambda i, j: (0, j)),                         # folded-BN bias
    ]
    args = [xf, xf, p['w'], p['scale'], p['bias']]
    if residual is not None:
        rp = jnp.pad(residual, ((0, nb * TOH - OH), (0, Wp - OW), (0, 0)))
        args.append(rp.reshape(nb * TOH * Wp, Cout))
        in_specs.append(pl.BlockSpec((L, TN), lambda i, j: (i, j)))
        kernel = functools.partial(_dconv_res_kernel, KH=KH, KW=KW, Wp=Wp, L=L)
    else:
        kernel = functools.partial(_dconv_kernel, KH=KH, KW=KW, Wp=Wp, L=L, relu=relu)

    out = pl.pallas_call(
        kernel,
        grid=(nb, nn),
        in_specs=in_specs,
        out_specs=pl.BlockSpec((L, TN), lambda i, j: (i, j)),
        out_shape=jax.ShapeDtypeStruct((nb * TOH * Wp, Cout), jnp.bfloat16),
        compiler_params=pltpu.CompilerParams(
            dimension_semantics=("parallel", "parallel"),
            vmem_limit_bytes=_vmem_limit()),
    )(*args)
    return out.reshape(nb * TOH, Wp, Cout)[:OH, :OW, :]


# ------------------- fused matmul (strided convs, 1x1 convs) -------------------

def _fused_matmul(A, Wm, scale, bias, relu, residual=None):
    """A:(M,K) bf16 @ Wm:(K,Cout) bf16, per-channel scale/bias (+res) (+ReLU); M/N tiled."""
    M, K = A.shape
    Cout = Wm.shape[1]
    Mp = _round_up(M, 8)
    if Mp != M:
        A = jnp.pad(A, ((0, Mp - M), (0, 0)))
        if residual is not None:
            residual = jnp.pad(residual, ((0, Mp - M), (0, 0)))
    TM = Mp if Mp <= 1024 else 1024
    TN = min(Cout, 256)
    assert Cout % TN == 0
    if pl.cdiv(Mp, TM) * (Cout // TN) < 2 and Mp >= 16:     # keep both v7x TCs busy
        TM = _round_up((Mp + 1) // 2, 8)
    grid = (pl.cdiv(Mp, TM), Cout // TN)

    in_specs = [
        pl.BlockSpec((TM, K), lambda i, j: (i, 0)),
        pl.BlockSpec((K, TN), lambda i, j: (0, j)),
        pl.BlockSpec((1, TN), lambda i, j: (0, j)),
        pl.BlockSpec((1, TN), lambda i, j: (0, j)),
    ]
    args = [A, Wm, scale, bias]
    if residual is not None:
        in_specs.append(pl.BlockSpec((TM, TN), lambda i, j: (i, j)))
        args.append(residual)
        kernel = _mm_bn_res_kernel
    else:
        kernel = functools.partial(_mm_bn_kernel, relu=relu)

    out = pl.pallas_call(
        kernel,
        grid=grid,
        in_specs=in_specs,
        out_specs=pl.BlockSpec((TM, TN), lambda i, j: (i, j)),
        out_shape=jax.ShapeDtypeStruct((Mp, Cout), jnp.bfloat16),
        compiler_params=pltpu.CompilerParams(
            dimension_semantics=("parallel", "parallel"),
            vmem_limit_bytes=_vmem_limit()),
    )(*args)
    return out[:M]


def _strided_conv(x, p, stride, padding, relu=True):
    """Strided conv (7x7 s2 stem, 3x3 s2, 1x1 s2 downsample): bf16 im2col + fused matmul."""
    H, W, Cin = x.shape
    KH = p['w'].shape[0]
    KW = p['w'].shape[1] // Cin
    Cout = p['w'].shape[-1]
    OH = (H + 2 * padding - KH) // stride + 1
    OW = (W + 2 * padding - KW) // stride + 1
    xp = jnp.pad(x, ((padding, padding), (padding, padding), (0, 0)))
    cols = []
    for kh in range(KH):
        for kw in range(KW):
            cols.append(xp[kh:kh + (OH - 1) * stride + 1:stride,
                           kw:kw + (OW - 1) * stride + 1:stride, :])
    A = jnp.concatenate(cols, axis=-1).reshape(OH * OW, KH * KW * Cin)
    out = _fused_matmul(A, p['w'].reshape(KH * KW * Cin, Cout),
                        p['scale'], p['bias'], relu)
    return out.reshape(OH, OW, Cout)


def _conv_bn_act(x, p, stride, padding, relu=True, residual=None):
    H, W, Cin = x.shape
    KH = p['w'].shape[0]
    KW = p['w'].shape[1] // Cin
    Cout = p['w'].shape[-1]
    if KH == 1 and KW == 1 and stride == 1:
        # 1x1 stride-1 fast path: plain tiled matmul, no halo / im2col overhead at all
        assert residual is None or relu
        r = None if residual is None else residual.reshape(H * W, Cout)
        out = _fused_matmul(x.reshape(H * W, Cin), p['w'].reshape(Cin, Cout),
                            p['scale'], p['bias'], relu, residual=r)
        return out.reshape(H, W, Cout)
    if stride == 1:
        return _direct_conv(x, p, padding, relu=relu, residual=residual)
    assert residual is None
    return _strided_conv(x, p, stride, padding, relu=relu)


# -------------------------------- maxpool --------------------------------

def _max3_tiled(a, b, c):
    M, C = a.shape
    TM = M if M <= 4096 else 4096
    return pl.pallas_call(
        _max3_kernel,
        grid=(pl.cdiv(M, TM),),
        in_specs=[pl.BlockSpec((TM, C), lambda i: (i, 0))] * 3,
        out_specs=pl.BlockSpec((TM, C), lambda i: (i, 0)),
        out_shape=jax.ShapeDtypeStruct((M, C), a.dtype),
        compiler_params=pltpu.CompilerParams(dimension_semantics=("parallel",)),
    )(a, b, c)


def _maxpool_3x3_s2(x):
    """MaxPool2d(3, stride=2, padding=1), separable: W-direction pass then H-direction."""
    # TODO(synk): a single row-tiled kernel taking the strided taps in-kernel would cut
    # the intermediate HBM traffic of this two-pass form (minor: pool runs once).
    H, W, C = x.shape
    OH = (H - 1) // 2 + 1
    OW = (W - 1) // 2 + 1
    xp = jnp.pad(x, ((1, 1), (1, 1), (0, 0)), constant_values=float('-inf'))
    Hp = H + 2
    cols = [xp[:, kw:kw + 2 * (OW - 1) + 1:2, :].reshape(Hp * OW, C) for kw in range(3)]
    y1 = _max3_tiled(*cols).reshape(Hp, OW, C)
    rows = [y1[kh:kh + 2 * (OH - 1) + 1:2, :, :].reshape(OH * OW, C) for kh in range(3)]
    return _max3_tiled(*rows).reshape(OH, OW, C)


# ----------------------------- ResNet blocks -----------------------------

def _basic_block(x, p, stride):
    identity = x
    out = _conv_bn_act(x, p['conv1'], stride=stride, padding=1, relu=True)
    if 'down' in p:
        identity = _conv_bn_act(x, p['down'], stride=stride, padding=0, relu=False)
    # TODO(synk): fuse the 1x1 downsample into the residual-add kernel to save one
    # HBM round trip of the identity tensor.
    return _conv_bn_act(out, p['conv2'], stride=1, padding=1, relu=True, residual=identity)


def _bottleneck_block(x, p, stride):
    identity = x
    out = _conv_bn_act(x, p['conv1'], stride=1, padding=0, relu=True)
    out = _conv_bn_act(out, p['conv2'], stride=stride, padding=1, relu=True)
    if 'down' in p:
        identity = _conv_bn_act(x, p['down'], stride=stride, padding=0, relu=False)
    return _conv_bn_act(out, p['conv3'], stride=1, padding=0, relu=True, residual=identity)


_CONFIGS = {
    'resnet18': ('basic', [2, 2, 2, 2]),
    'resnet34': ('basic', [3, 4, 6, 3]),
    'resnet50': ('bottleneck', [3, 4, 6, 3]),
    'resnet101': ('bottleneck', [3, 4, 23, 3]),
    'resnet152': ('bottleneck', [3, 8, 36, 3]),
}


def _init_conv_bn(key, kh, kw, cin, cout):
    kw_, kg, kb, km, kv = jax.random.split(key, 5)
    w = jax.random.normal(kw_, (kh, kw, cin, cout), jnp.float32) / np.sqrt(kh * kw * cin)
    gamma = 1.0 + 0.1 * jax.random.normal(kg, (cout,), jnp.float32)
    beta = 0.1 * jax.random.normal(kb, (cout,), jnp.float32)
    rmean = 0.1 * jax.random.normal(km, (cout,), jnp.float32)
    rvar = 0.5 + jnp.abs(jax.random.normal(kv, (cout,), jnp.float32))
    # eval-mode BatchNorm folded into per-channel affine (backbone is frozen)
    scale = gamma / jnp.sqrt(rvar + 1e-5)
    bias = beta - rmean * scale
    return {'w': w.reshape(kh, kw * cin, cout).astype(jnp.bfloat16),  # (KH, KW*Cin, Cout)
            'scale': scale.reshape(1, cout),
            'bias': bias.reshape(1, cout)}


def build_params(encoder, key):
    block_type, layers = _CONFIGS[encoder]
    expansion = 1 if block_type == 'basic' else 4
    counter = [0]

    def nk():
        counter[0] += 1
        return jax.random.fold_in(key, counter[0])

    params = {'stem': _init_conv_bn(nk(), 7, 7, 3, 64)}       # resnet.conv1 / bn1
    inplanes = 64
    for li, planes, nblocks, stride in zip((1, 2, 3), (64, 128, 256), layers[:3], (1, 2, 2)):
        blocks = []
        for b in range(nblocks):
            s = stride if b == 0 else 1
            outc = planes * expansion
            bp = {}
            if block_type == 'basic':
                bp['conv1'] = _init_conv_bn(nk(), 3, 3, inplanes, planes)
                bp['conv2'] = _init_conv_bn(nk(), 3, 3, planes, planes)
            else:
                bp['conv1'] = _init_conv_bn(nk(), 1, 1, inplanes, planes)
                bp['conv2'] = _init_conv_bn(nk(), 3, 3, planes, planes)
                bp['conv3'] = _init_conv_bn(nk(), 1, 1, planes, outc)
            if s != 1 or inplanes != outc:
                bp['down'] = _init_conv_bn(nk(), 1, 1, inplanes, outc)
            blocks.append(bp)
            inplanes = outc
        params[f'layer{li}'] = blocks
    return params, block_type


def forward(params, x_hwc, block_type):
    """Mirrors CustomResNet.forward: x [H,W,3] -> (xc [C,H/16,W/16], xf [C,H/8,W/8])."""
    block_fn = _basic_block if block_type == 'basic' else _bottleneck_block
    x = x_hwc.astype(jnp.bfloat16)                            # (H, W, 3) NHWC, bf16 in HBM
    x = _conv_bn_act(x, params['stem'], stride=2, padding=3, relu=True)   # conv1+bn1+relu
    x = _maxpool_3x3_s2(x)                                    # firstmaxpool
    xf = None
    for layer_name, layer_stride in (('layer1', 1), ('layer2', 2), ('layer3', 2)):
        for i, bp in enumerate(params[layer_name]):
            x = block_fn(x, bp, layer_stride if i == 0 else 1)
        if layer_name == 'layer2':
            xf = x
    xc = x
    # squeeze batch + channel-first, like the torch module's returned numpy arrays
    return (jnp.transpose(xc, (2, 0, 1)).astype(jnp.float32),
            jnp.transpose(xf, (2, 0, 1)).astype(jnp.float32))


if __name__ == "__main__":
    # module supports resnet{18,34,50,101,152}; use the lightest config for the small demo
    encoder = 'resnet18'
    key = jax.random.PRNGKey(0)
    pkey, xkey = jax.random.split(key)
    params, block_type = build_params(encoder, pkey)

    # --- unit check: grouped-tap direct-conv (+BN+residual+ReLU) vs an XLA reference ---
    tkey = jax.random.fold_in(key, 7)
    cp = _init_conv_bn(jax.random.fold_in(tkey, 1), 3, 3, 64, 64)
    xt = jax.random.normal(jax.random.fold_in(tkey, 2), (12, 12, 64), jnp.float32).astype(jnp.bfloat16)
    rt = jax.random.normal(jax.random.fold_in(tkey, 3), (12, 12, 64), jnp.float32).astype(jnp.bfloat16)
    got = _direct_conv(xt, cp, padding=1, relu=True, residual=rt).astype(jnp.float32)
    w4 = cp['w'].astype(jnp.float32).reshape(3, 3, 64, 64)
    ref = jax.lax.conv_general_dilated(
        xt.astype(jnp.float32)[None], w4, (1, 1), ((1, 1), (1, 1)),
        dimension_numbers=('NHWC', 'HWIO', 'NHWC'),
        precision=jax.lax.Precision.HIGHEST)[0]
    ref = jnp.maximum(ref * cp['scale'][0] + cp['bias'][0] + rt.astype(jnp.float32), 0.0)
    assert float(jnp.max(jnp.abs(got - ref))) < 0.1, "direct-conv kernel mismatch"

    H, W = 32, 32
    x = jax.random.normal(xkey, (H, W, 3), jnp.float32)       # module input: [H, W, C]

    fwd = jax.jit(functools.partial(forward, block_type=block_type))
    xc, xf = fwd(params, x)
    jax.block_until_ready((xc, xf))

    exp = 1 if block_type == 'basic' else 4
    assert xc.shape == (256 * exp, H // 16, W // 16), xc.shape
    assert xf.shape == (128 * exp, H // 8, W // 8), xf.shape
    assert bool(jnp.all(jnp.isfinite(xc))) and bool(jnp.all(jnp.isfinite(xf)))
    print("KERNEL_OK")
</pallas_src>

<mosaic_0001>
module attributes {stable_mosaic.version = 11 : i64} {
  func.func @_dconv_res_kernel(%arg0: i32, %arg1: i32, %arg2: memref<224x64xbf16, #tpu.memory_space<vmem>>, %arg3: memref<56x64xbf16, #tpu.memory_space<vmem>>, %arg4: memref<3x192x64xbf16, #tpu.memory_space<vmem>>, %arg5: memref<1x64xf32, #tpu.memory_space<vmem>>, %arg6: memref<1x64xf32, #tpu.memory_space<vmem>>, %arg7: memref<224x64xbf16, #tpu.memory_space<vmem>>, %arg8: memref<224x64xbf16, #tpu.memory_space<vmem>>) attributes {dimension_semantics = [#tpu.dimension_semantics<parallel>, #tpu.dimension_semantics<parallel>], iteration_bounds = array<i64: 1, 1>, scalar_prefetch = 0 : i64, scratch_operands = 0 : i64, tpu.core_type = #tpu.core_type<tc>, window_params = [{transform_indices = @transform_0, window_bounds = array<i64: 224, 64>}, {transform_indices = @transform_1, window_bounds = array<i64: 56, 64>}, {transform_indices = @transform_2, window_bounds = array<i64: 3, 192, 64>}, {transform_indices = @transform_3, window_bounds = array<i64: 1, 64>}, {transform_indices = @transform_4, window_bounds = array<i64: 1, 64>}, {transform_indices = @transform_5, window_bounds = array<i64: 224, 64>}, {transform_indices = @transform_6, window_bounds = array<i64: 224, 64>}]} {
    %c0 = arith.constant 0 : index
    %c0_0 = arith.constant 0 : index
    %0 = vector.load %arg2[%c0, %c0_0] : memref<224x64xbf16, #tpu.memory_space<vmem>>, vector<224x64xbf16>
    %c0_1 = arith.constant 0 : index
    %c0_2 = arith.constant 0 : index
    %1 = vector.load %arg3[%c0_1, %c0_2] : memref<56x64xbf16, #tpu.memory_space<vmem>>, vector<56x64xbf16>
    %2 = tpu.concatenate %0, %1 in 0 : vector<224x64xbf16>, vector<56x64xbf16> -> vector<280x64xbf16>
    %cst = arith.constant 0.000000e+00 : f32
    %3 = vector.broadcast %cst : f32 to vector<224x64xf32>
    %4 = vector.extract_strided_slice %2 {offsets = [0, 0], sizes = [224, 64], strides = [1, 1]} : vector<280x64xbf16> to vector<224x64xbf16>
    %5 = vector.extract_strided_slice %2 {offsets = [1, 0], sizes = [224, 64], strides = [1, 1]} : vector<280x64xbf16> to vector<224x64xbf16>
    %6 = vector.extract_strided_slice %2 {offsets = [2, 0], sizes = [224, 64], strides = [1, 1]} : vector<280x64xbf16> to vector<224x64xbf16>
    %7 = tpu.concatenate %4, %5, %6 in 1 : vector<224x64xbf16>, vector<224x64xbf16>, vector<224x64xbf16> -> vector<224x192xbf16>
    %c0_3 = arith.constant 0 : index
    %c0_4 = arith.constant 0 : index
    %c0_5 = arith.constant 0 : index
    %8 = vector.load %arg4[%c0_3, %c0_4, %c0_5] : memref<3x192x64xbf16, #tpu.memory_space<vmem>>, vector<1x192x64xbf16>
    %9 = vector.shape_cast %8 : vector<1x192x64xbf16> to vector<192x64xbf16>
    %cst_6 = arith.constant dense<0.000000e+00> : vector<224x64xf32>
    %10 = tpu.matmul %7, %9, %cst_6 {dimension_numbers = #tpu.dot_dimension_numbers<[1], [0], [0], [1], [0, 0, 1, 1], [], []>} : vector<224x192xbf16>, vector<192x64xbf16>, vector<224x64xf32> -> vector<224x64xf32>
    %11 = arith.addf %3, %10 : vector<224x64xf32>
    %12 = vector.extract_strided_slice %2 {offsets = [14, 0], sizes = [224, 64], strides = [1, 1]} : vector<280x64xbf16> to vector<224x64xbf16>
    %13 = vector.extract_strided_slice %2 {offsets = [15, 0], sizes = [224, 64], strides = [1, 1]} : vector<280x64xbf16> to vector<224x64xbf16>
    %14 = vector.extract_strided_slice %2 {offsets = [16, 0], sizes = [224, 64], strides = [1, 1]} : vector<280x64xbf16> to vector<224x64xbf16>
    %15 = tpu.concatenate %12, %13, %14 in 1 : vector<224x64xbf16>, vector<224x64xbf16>, vector<224x64xbf16> -> vector<224x192xbf16>
    %c1 = arith.constant 1 : index
    %c0_7 = arith.constant 0 : index
    %c0_8 = arith.constant 0 : index
    %16 = vector.load %arg4[%c1, %c0_7, %c0_8] : memref<3x192x64xbf16, #tpu.memory_space<vmem>>, vector<1x192x64xbf16>
    %17 = vector.shape_cast %16 : vector<1x192x64xbf16> to vector<192x64xbf16>
    %cst_9 = arith.constant dense<0.000000e+00> : vector<224x64xf32>
    %18 = tpu.matmul %15, %17, %cst_9 {dimension_numbers = #tpu.dot_dimension_numbers<[1], [0], [0], [1], [0, 0, 1, 1], [], []>} : vector<224x192xbf16>, vector<192x64xbf16>, vector<224x64xf32> -> vector<224x64xf32>
    %19 = arith.addf %11, %18 : vector<224x64xf32>
    %20 = vector.extract_strided_slice %2 {offsets = [28, 0], sizes = [224, 64], strides = [1, 1]} : vector<280x64xbf16> to vector<224x64xbf16>
    %21 = vector.extract_strided_slice %2 {offsets = [29, 0], sizes = [224, 64], strides = [1, 1]} : vector<280x64xbf16> to vector<224x64xbf16>
    %22 = vector.extract_strided_slice %2 {offsets = [30, 0], sizes = [224, 64], strides = [1, 1]} : vector<280x64xbf16> to vector<224x64xbf16>
    %23 = tpu.concatenate %20, %21, %22 in 1 : vector<224x64xbf16>, vector<224x64xbf16>, vector<224x64xbf16> -> vector<224x192xbf16>
    %c2 = arith.constant 2 : index
    %c0_10 = arith.constant 0 : index
    %c0_11 = arith.constant 0 : index
    %24 = vector.load %arg4[%c2, %c0_10, %c0_11] : memref<3x192x64xbf16, #tpu.memory_space<vmem>>, vector<1x192x64xbf16>
    %25 = vector.shape_cast %24 : vector<1x192x64xbf16> to vector<192x64xbf16>
    %cst_12 = arith.constant dense<0.000000e+00> : vector<224x64xf32>
    %26 = tpu.matmul %23, %25, %cst_12 {dimension_numbers = #tpu.dot_dimension_numbers<[1], [0], [0], [1], [0, 0, 1, 1], [], []>} : vector<224x192xbf16>, vector<192x64xbf16>, vector<224x64xf32> -> vector<224x64xf32>
    %27 = arith.addf %19, %26 : vector<224x64xf32>
    %c0_13 = arith.constant 0 : index
    %c0_14 = arith.constant 0 : index
    %28 = vector.load %arg5[%c0_13, %c0_14] : memref<1x64xf32, #tpu.memory_space<vmem>>, vector<1x64xf32>
    %29 = vector.broadcast %28 : vector<1x64xf32> to vector<224x64xf32>
    %30 = arith.mulf %27, %29 : vector<224x64xf32>
    %c0_15 = arith.constant 0 : index
    %c0_16 = arith.constant 0 : index
    %31 = vector.load %arg6[%c0_15, %c0_16] : memref<1x64xf32, #tpu.memory_space<vmem>>, vector<1x64xf32>
    %32 = vector.broadcast %31 : vector<1x64xf32> to vector<224x64xf32>
    %33 = arith.addf %30, %32 : vector<224x64xf32>
    %c0_17 = arith.constant 0 : index
    %c0_18 = arith.constant 0 : index
    %34 = vector.load %arg7[%c0_17, %c0_18] : memref<224x64xbf16, #tpu.memory_space<vmem>>, vector<224x64xbf16>
    %35 = arith.extf %34 : vector<224x64xbf16> to vector<224x64xf32>
    %36 = arith.addf %33, %35 : vector<224x64xf32>
    %cst_19 = arith.constant 0.000000e+00 : f32
    %37 = vector.broadcast %cst_19 : f32 to vector<224x64xf32>
    %38 = arith.maximumf %36, %37 : vector<224x64xf32>
    %39 = arith.truncf %38 : vector<224x64xf32> to vector<224x64xbf16>
    %c0_20 = arith.constant 0 : index
    %c0_21 = arith.constant 0 : index
    %40 = vector.load %arg8[%c0_20, %c0_21] : memref<224x64xbf16, #tpu.memory_space<vmem>>, vector<224x64xbf16>
    tpu.vector_store %arg8[%c0_20, %c0_21], %39 {strides = array<i32>} : memref<224x64xbf16, #tpu.memory_space<vmem>>, vector<224x64xbf16>,
    return
  }
  func.func @transform_0(%arg0: i32, %arg1: i32) -> (i32, i32) {
    %c0_i32 = arith.constant 0 : i32
    %c0_i32_0 = arith.constant 0 : i32
    return %arg0, %c0_i32 : i32, i32
  }
  func.func @transform_1(%arg0: i32, %arg1: i32) -> (i32, i32) {
    %c1_i32 = arith.constant 1 : i32
    %0 = arith.addi %arg0, %c1_i32 : i32
    %c4_i32 = arith.constant 4 : i32
    %1 = arith.muli %0, %c4_i32 : i32
    %c0_i32 = arith.constant 0 : i32
    %c0_i32_0 = arith.constant 0 : i32
    return %1, %c0_i32 : i32, i32
  }
  func.func @transform_2(%arg0: i32, %arg1: i32) -> (i32, i32, i32) {
    %c0_i32 = arith.constant 0 : i32
    %c0_i32_0 = arith.constant 0 : i32
    %c0_i32_1 = arith.constant 0 : i32
    return %c0_i32, %c0_i32_0, %arg1 : i32, i32, i32
  }
  func.func @transform_3(%arg0: i32, %arg1: i32) -> (i32, i32) {
    %c0_i32 = arith.constant 0 : i32
    %c0_i32_0 = arith.constant 0 : i32
    return %c0_i32, %arg1 : i32, i32
  }
  func.func @transform_4(%arg0: i32, %arg1: i32) -> (i32, i32) {
    %c0_i32 = arith.constant 0 : i32
    %c0_i32_0 = arith.constant 0 : i32
    return %c0_i32, %arg1 : i32, i32
  }
  func.func @transform_5(%arg0: i32, %arg1: i32) -> (i32, i32) {
    %c0_i32 = arith.constant 0 : i32
    return %arg0, %arg1 : i32, i32
  }
  func.func @transform_6(%arg0: i32, %arg1: i32) -> (i32, i32) {
    %c0_i32 = arith.constant 0 : i32
    return %arg0, %arg1 : i32, i32
  }
}

</mosaic_0001>

<llo_original>
// kernel: tpu_custom_call.1
$region0: #{tpu_custom_call.1}
  #allocation0 [shape = 'u32[]', space=smem, size = 0x4, offset = 0x4, fixed_abs, tag = 'smem constant byte address 0x4 - core index']
  #allocation1 [shape = 'u32[144,128]{1,0:T(1,128)}', space=vmem, size = 0x12000, scoped, tag = 'internal scratch']
  %s0 = inlined_call_operand.vmem [shape: bf16[280,64], index: 0, kind: input, shape index: {}]
  %s1 = inlined_call_operand.vmem [shape: bf16[280,64], index: 1, kind: input, shape index: {}]
  %s2 = inlined_call_operand.vmem [shape: bf16[3,192,64], index: 2, kind: input, shape index: {}]
  %s3 = inlined_call_operand.vmem [shape: f32[1,64], index: 3, kind: input, shape index: {}]
  %s4 = inlined_call_operand.vmem [shape: f32[1,64], index: 4, kind: input, shape index: {}]
  %s5 = inlined_call_operand.vmem [shape: bf16[224,64], index: 5, kind: input, shape index: {}]
  %s6 = inlined_call_operand.vmem [shape: bf16[224,64], index: 6, kind: output, shape index: {}]
  %s7 = sld [smem:[#allocation0]]
  $region34: #{tpu_custom_call.1} parent=0
    _
  %s9 = ssub.s32 1, %s7
  %s10 = scalar_select 0, %s9, %s7
  // Predicated region
  $region2: #{tpu_custom_call.1} parent=0 // pred_check
    _
  $region3: #{tpu_custom_call.1} parent=0 // pred_check_branch
    %12 = sbr.rel (0) target = $region5
  $region4: #{tpu_custom_call.1} parent=0 // pred_region
    _
  $region5: #{tpu_custom_call.1} parent=0 // pred_fallthru
    _
  // Predicated region
  $region6: #{tpu_custom_call.1} parent=0 // pred_check
    _
  $region7: #{tpu_custom_call.1} parent=0 // pred_check_branch
    %14 = sbr.rel (0) target = $region9
  $region8: #{tpu_custom_call.1} parent=0 // pred_region
    %s15 = sadd.s32 0, 1
    %s16 = smul.u32 %s15, 4
    %s17 = smul.u32 7, %s16
    %p18 = scmp.lt.s32.totalorder %s17, 34
    %s19 = scalar_select %p18, %s17, 34
    %s20 = smul.addr %s19, 4
    %s21 = scalar_lea.vmem %s1, %s20
    %s22 = sadd.s32 0, 1
    %s23 = smul.u32 %s22, 4
    %s24 = smul.u32 7, %s23
  $region9: #{tpu_custom_call.1} parent=0 // pred_fallthru
    _
  // Predicated region
  $region10: #{tpu_custom_call.1} parent=0 // pred_check
    _
  $region11: #{tpu_custom_call.1} parent=0 // pred_check_branch
    %26 = sbr.rel (0) target = $region13
  $region12: #{tpu_custom_call.1} parent=0 // pred_region
    _
  $region13: #{tpu_custom_call.1} parent=0 // pred_fallthru
    _
  // Predicated region
  $region14: #{tpu_custom_call.1} parent=0 // pred_check
    _
  $region15: #{tpu_custom_call.1} parent=0 // pred_check_branch
    %28 = sbr.rel (0) target = $region17
  $region16: #{tpu_custom_call.1} parent=0 // pred_region
    _
  $region17: #{tpu_custom_call.1} parent=0 // pred_fallthru
    _
  // Predicated region
  $region18: #{tpu_custom_call.1} parent=0 // pred_check
    _
  $region19: #{tpu_custom_call.1} parent=0 // pred_check_branch
    %30 = sbr.rel (0) target = $region21
  $region20: #{tpu_custom_call.1} parent=0 // pred_region
    _
  $region21: #{tpu_custom_call.1} parent=0 // pred_fallthru
    _
  // Predicated region
  $region22: #{tpu_custom_call.1} parent=0 // pred_check
    _
  $region23: #{tpu_custom_call.1} parent=0 // pred_check_branch
    %32 = sbr.rel (0) target = $region25
  $region24: #{tpu_custom_call.1} parent=0 // pred_region
    _
  $region25: #{tpu_custom_call.1} parent=0 // pred_fallthru
    _
  %s33 = sadd.s32 0, 1
  %s34 = smul.u32 %s33, 4
  %s35 = smul.u32 7, %s34
  %p36 = scmp.lt.s32.totalorder %s35, 34
  %s37 = scalar_select %p36, %s35, 34
  %s38 = smul.addr %s37, 4
  %s39 = scalar_lea.vmem %s1, %s38
  %s40 = sadd.s32 0, 1
  %s41 = smul.u32 %s40, 4
  %s42 = smul.u32 7, %s41
  %p43 = scmp.lt.s32.totalorder %s42, 34
  %s44 = scalar_select %p43, %s42, 34
  %s45 = smul.addr %s44, 4
  %s46 = scalar_lea.vmem %s1, %s45
  %s47 = sadd.s32 0, 1
  %s48 = smul.u32 %s47, 4
  %s49 = smul.u32 7, %s48
  %v51 = vld [vmem:[%s0] sm:$0xf]
  %v52 = vld [vmem:[%s0 + $0x4] sm:$0xf]
  %v53 = vld [vmem:[%s0 + $0x8] sm:$0xf]
  %v54 = vld [vmem:[%s0 + $0xc] sm:$0xf]
  %v55 = vld [vmem:[%s0 + $0x10] sm:$0xf]
  %v56 = vld [vmem:[%s0 + $0x14] sm:$0xf]
  %v57 = vld [vmem:[%s0 + $0x18] sm:$0xf]
  %v58 = vld [vmem:[%s0 + $0x1c] sm:$0xf]
  %v59 = vld [vmem:[%s0 + $0x20] sm:$0xf]
  %v60 = vld [vmem:[%s0 + $0x24] sm:$0xf]
  %v61 = vld [vmem:[%s0 + $0x28] sm:$0xf]
  %v62 = vld [vmem:[%s0 + $0x2c] sm:$0xf]
  %v63 = vld [vmem:[%s0 + $0x30] sm:$0xf]
  %v64 = vld [vmem:[%s0 + $0x34] sm:$0xf]
  %v65 = vld [vmem:[%s0 + $0x38] sm:$0xf]
  %v66 = vld [vmem:[%s0 + $0x3c] sm:$0xf]
  %v67 = vld [vmem:[%s0 + $0x40] sm:$0xf]
  %v68 = vld [vmem:[%s0 + $0x44] sm:$0xf]
  %v69 = vld [vmem:[%s0 + $0x48] sm:$0xf]
  %v70 = vld [vmem:[%s0 + $0x4c] sm:$0xf]
  %v71 = vld [vmem:[%s0 + $0x50] sm:$0xf]
  %v72 = vld [vmem:[%s0 + $0x54] sm:$0xf]
  %v73 = vld [vmem:[%s0 + $0x58] sm:$0xf]
  %v74 = vld [vmem:[%s0 + $0x5c] sm:$0xf]
  %v75 = vld [vmem:[%s0 + $0x60] sm:$0xf]
  %v76 = vld [vmem:[%s0 + $0x64] sm:$0xf]
  %v77 = vld [vmem:[%s0 + $0x68] sm:$0xf]
  %v78 = vld [vmem:[%s0 + $0x6c] sm:$0xf]
  %v79 = vld [vmem:[%s46] sm:$0xf]
  %v80 = vld [vmem:[%s46 + $0x4] sm:$0xf]
  %v81 = vld [vmem:[%s46 + $0x8] sm:$0xf]
  %v82 = vld [vmem:[%s46 + $0xc] sm:$0xf]
  %v111 = vunpack.c.l.b16 %v51
  %v112 = vunpack.c.l.b16 %v52
  %v113 = vunpack.c.l.b16 %v53
  %v114 = vunpack.c.l.b16 %v54
  %v115 = vunpack.c.l.b16 %v55
  %v116 = vunpack.c.l.b16 %v56
  %v117 = vunpack.c.l.b16 %v57
  %v118 = vunpack.c.l.b16 %v58
  %v119 = vunpack.c.l.b16 %v59
  %v120 = vunpack.c.l.b16 %v60
  %v121 = vunpack.c.l.b16 %v61
  %v122 = vunpack.c.l.b16 %v62
  %v123 = vunpack.c.l.b16 %v63
  %v124 = vunpack.c.l.b16 %v64
  %v125 = vunpack.c.l.b16 %v65
  %v126 = vunpack.c.l.b16 %v66
  %v127 = vunpack.c.l.b16 %v67
  %v128 = vunpack.c.l.b16 %v68
  %v129 = vunpack.c.l.b16 %v69
  %v130 = vunpack.c.l.b16 %v70
  %v131 = vunpack.c.l.b16 %v71
  %v132 = vunpack.c.l.b16 %v72
  %v133 = vunpack.c.l.b16 %v73
  %v134 = vunpack.c.l.b16 %v74
  %v135 = vunpack.c.l.b16 %v75
  %v136 = vunpack.c.l.b16 %v76
  %v137 = vunpack.c.l.b16 %v77
  %v138 = vunpack.c.l.b16 %v78
  %v139 = vpack.c.b16 %v112, %v111
  %v140 = vpack.c.b16 %v114, %v113
  %v141 = vpack.c.b16 %v116, %v115
  %v142 = vpack.c.b16 %v118, %v117
  %v143 = vpack.c.b16 %v120, %v119
  %v144 = vpack.c.b16 %v122, %v121
  %v145 = vpack.c.b16 %v124, %v123
  %v146 = vpack.c.b16 %v126, %v125
  %v147 = vpack.c.b16 %v128, %v127
  %v148 = vpack.c.b16 %v130, %v129
  %v149 = vpack.c.b16 %v132, %v131
  %v150 = vpack.c.b16 %v134, %v133
  %v151 = vpack.c.b16 %v136, %v135
  %v152 = vpack.c.b16 %v138, %v137
  %v157 = vunpack.c.l.b16 %v79
  %v158 = vunpack.c.l.b16 %v80
  %v159 = vunpack.c.l.b16 %v81
  %v160 = vunpack.c.l.b16 %v82
  %v161 = vpack.c.b16 %v158, %v157
  %v162 = vpack.c.b16 %v160, %v159
  %vm163 = vsmask.f32 7424
  %v165 = vshrl.u32 %v139, 16
  %v167 = vshll.u32 %v139, 16
  %v169 = vrot.slane %v167, 1
  %v170 = vor.u32 %v165, %v169
  %v172 = vshll.u32 %v140, 16
  %v174 = vrot.slane %v172, 1
  %v175 = vsel %vm163, %v170, %v174
  %v176 = vshrl.u32 %v140, 16
  %v178 = vor.u32 %v176, %v174
  %v180 = vshll.u32 %v141, 16
  %v182 = vrot.slane %v180, 1
  %v183 = vsel %vm163, %v178, %v182
  %v184 = vshrl.u32 %v141, 16
  %v186 = vor.u32 %v184, %v182
  %v188 = vshll.u32 %v142, 16
  %v190 = vrot.slane %v188, 1
  %v191 = vsel %vm163, %v186, %v190
  %v192 = vshrl.u32 %v142, 16
  %v194 = vor.u32 %v192, %v190
  %v196 = vshll.u32 %v143, 16
  %v198 = vrot.slane %v196, 1
  %v199 = vsel %vm163, %v194, %v198
  %v200 = vshrl.u32 %v143, 16
  %v202 = vor.u32 %v200, %v198
  %v204 = vshll.u32 %v144, 16
  %v206 = vrot.slane %v204, 1
  %v207 = vsel %vm163, %v202, %v206
  %v208 = vshrl.u32 %v144, 16
  %v210 = vor.u32 %v208, %v206
  %v212 = vshll.u32 %v145, 16
  %v214 = vrot.slane %v212, 1
  %v215 = vsel %vm163, %v210, %v214
  %v216 = vshrl.u32 %v145, 16
  %v218 = vor.u32 %v216, %v214
  %v220 = vshll.u32 %v146, 16
  %v222 = vrot.slane %v220, 1
  %v223 = vsel %vm163, %v218, %v222
  %v224 = vshrl.u32 %v146, 16
  %v226 = vor.u32 %v224, %v222
  %v228 = vshll.u32 %v147, 16
  %v230 = vrot.slane %v228, 1
  %v231 = vsel %vm163, %v226, %v230
  %v232 = vshrl.u32 %v147, 16
  %v234 = vor.u32 %v232, %v230
  %v236 = vshll.u32 %v148, 16
  %v238 = vrot.slane %v236, 1
  %v239 = vsel %vm163, %v234, %v238
  %v240 = vshrl.u32 %v148, 16
  %v242 = vor.u32 %v240, %v238
  %v244 = vshll.u32 %v149, 16
  %v246 = vrot.slane %v244, 1
  %v247 = vsel %vm163, %v242, %v246
  %v248 = vshrl.u32 %v149, 16
  %v250 = vor.u32 %v248, %v246
  %v252 = vshll.u32 %v150, 16
  %v254 = vrot.slane %v252, 1
  %v255 = vsel %vm163, %v250, %v254
  %v256 = vshrl.u32 %v150, 16
  %v258 = vor.u32 %v256, %v254
  %v260 = vshll.u32 %v151, 16
  %v262 = vrot.slane %v260, 1
  %v263 = vsel %vm163, %v258, %v262
  %v264 = vshrl.u32 %v151, 16
  %v266 = vor.u32 %v264, %v262
  %v268 = vshll.u32 %v152, 16
  %v270 = vrot.slane %v268, 1
  %v271 = vsel %vm163, %v266, %v270
  %v272 = vshrl.u32 %v152, 16
  %v274 = vor.u32 %v272, %v270
  %v276 = vshll.u32 %v161, 16
  %v278 = vrot.slane %v276, 1
  %v279 = vsel %vm163, %v274, %v278
  %280 = vrot.lane.b32.xlu0 %v175, 64
  %v281 = vpop.permute.xlu0 %280
  %282 = vrot.lane.b32.xlu0 %v183, 64
  %v283 = vpop.permute.xlu0 %282
  %284 = vrot.lane.b32.xlu0 %v191, 64
  %v285 = vpop.permute.xlu0 %284
  %286 = vrot.lane.b32.xlu0 %v199, 64
  %v287 = vpop.permute.xlu0 %286
  %288 = vrot.lane.b32.xlu0 %v207, 64
  %v289 = vpop.permute.xlu0 %288
  %290 = vrot.lane.b32.xlu0 %v215, 64
  %v291 = vpop.permute.xlu0 %290
  %292 = vrot.lane.b32.xlu0 %v223, 64
  %v293 = vpop.permute.xlu0 %292
  %294 = vrot.lane.b32.xlu0 %v231, 64
  %v295 = vpop.permute.xlu0 %294
  %296 = vrot.lane.b32.xlu0 %v239, 64
  %v297 = vpop.permute.xlu0 %296
  %298 = vrot.lane.b32.xlu0 %v247, 64
  %v299 = vpop.permute.xlu0 %298
  %300 = vrot.lane.b32.xlu0 %v255, 64
  %v301 = vpop.permute.xlu0 %300
  %302 = vrot.lane.b32.xlu0 %v263, 64
  %v303 = vpop.permute.xlu0 %302
  %304 = vrot.lane.b32.xlu0 %v271, 64
  %v305 = vpop.permute.xlu0 %304
  %306 = vrot.lane.b32.xlu0 %v279, 64
  %v307 = vpop.permute.xlu0 %306
  %vm308 = vcmask 1046528
  %v309 = vrot.slane %v139, 1
  %v310 = vrot.slane %v140, 1
  %v311 = vsel %vm308, %v309, %v310
  %v312 = vrot.slane %v141, 1
  %v313 = vsel %vm308, %v310, %v312
  %v314 = vrot.slane %v142, 1
  %v315 = vsel %vm308, %v312, %v314
  %v316 = vrot.slane %v143, 1
  %v317 = vsel %vm308, %v314, %v316
  %v318 = vrot.slane %v144, 1
  %v319 = vsel %vm308, %v316, %v318
  %v320 = vrot.slane %v145, 1
  %v321 = vsel %vm308, %v318, %v320
  %v322 = vrot.slane %v146, 1
  %v323 = vsel %vm308, %v320, %v322
  %v324 = vrot.slane %v147, 1
  %v325 = vsel %vm308, %v322, %v324
  %v326 = vrot.slane %v148, 1
  %v327 = vsel %vm308, %v324, %v326
  %v328 = vrot.slane %v149, 1
  %v329 = vsel %vm308, %v326, %v328
  %v330 = vrot.slane %v150, 1
  %v331 = vsel %vm308, %v328, %v330
  %v332 = vrot.slane %v151, 1
  %v333 = vsel %vm308, %v330, %v332
  %v334 = vrot.slane %v152, 1
  %v335 = vsel %vm308, %v332, %v334
  %v336 = vrot.slane %v161, 1
  %v337 = vsel %vm308, %v334, %v336
  %vm338 = vcmask 523264
  %v340 = vsel %vm338, %v139, %v281
  %v343 = vsel %vm338, %v140, %v283
  %v346 = vsel %vm338, %v141, %v285
  %v349 = vsel %vm338, %v142, %v287
  %v352 = vsel %vm338, %v143, %v289
  %v355 = vsel %vm338, %v144, %v291
  %v358 = vsel %vm338, %v145, %v293
  %v361 = vsel %vm338, %v146, %v295
  %v364 = vsel %vm338, %v147, %v297
  %v367 = vsel %vm338, %v148, %v299
  %v370 = vsel %vm338, %v149, %v301
  %v373 = vsel %vm338, %v150, %v303
  %v376 = vsel %vm338, %v151, %v305
  %v379 = vsel %vm338, %v152, %v307
  %v381 = vld [vmem:[%s2] sm:$0xf]
  %v382 = vld [vmem:[%s2 + $0x4] sm:$0xf]
  %v383 = vld [vmem:[%s2 + $0x8] sm:$0xf]
  %v384 = vld [vmem:[%s2 + $0xc] sm:$0xf]
  %v385 = vld [vmem:[%s2 + $0x10] sm:$0xf]
  %v386 = vld [vmem:[%s2 + $0x14] sm:$0xf]
  %v387 = vld [vmem:[%s2 + $0x18] sm:$0xf]
  %v388 = vld [vmem:[%s2 + $0x1c] sm:$0xf]
  %v389 = vld [vmem:[%s2 + $0x20] sm:$0xf]
  %v390 = vld [vmem:[%s2 + $0x24] sm:$0xf]
  %v391 = vld [vmem:[%s2 + $0x28] sm:$0xf]
  %v392 = vld [vmem:[%s2 + $0x2c] sm:$0xf]
  %v393 = vld [vmem:[%s2 + $0x30] sm:$0xf]
  %v394 = vld [vmem:[%s2 + $0x34] sm:$0xf]
  %v395 = vld [vmem:[%s2 + $0x38] sm:$0xf]
  %v396 = vld [vmem:[%s2 + $0x3c] sm:$0xf]
  %v397 = vld [vmem:[%s2 + $0x40] sm:$0xf]
  %v398 = vld [vmem:[%s2 + $0x44] sm:$0xf]
  %v399 = vld [vmem:[%s2 + $0x48] sm:$0xf]
  %v400 = vld [vmem:[%s2 + $0x4c] sm:$0xf]
  %v401 = vld [vmem:[%s2 + $0x50] sm:$0xf]
  %v402 = vld [vmem:[%s2 + $0x54] sm:$0xf]
  %v403 = vld [vmem:[%s2 + $0x58] sm:$0xf]
  %v404 = vld [vmem:[%s2 + $0x5c] sm:$0xf]
  %v405 = vsel %vm163, %v165, %v174
  %v406 = vshrl.u32 %v161, 16
  %v408 = vor.u32 %v406, %v278
  %409 = vrot.lane.b32.xlu0 %v405, 64
  %v410 = vpop.permute.xlu0 %409
  %411 = vrot.lane.b32.xlu0 %v408, 64
  %v412 = vpop.permute.xlu0 %411
  %v414 = vsel %vm338, %v139, %v410
  %v416 = vsel %vm338, %v161, %v412
  %s417 = scalar_lea.vmem %s2, 96
  %v418 = vld [vmem:[%s417] sm:$0xf]
  %v419 = vld [vmem:[%s417 + $0x4] sm:$0xf]
  %v420 = vld [vmem:[%s417 + $0x8] sm:$0xf]
  %v421 = vld [vmem:[%s417 + $0xc] sm:$0xf]
  %v422 = vld [vmem:[%s417 + $0x10] sm:$0xf]
  %v423 = vld [vmem:[%s417 + $0x14] sm:$0xf]
  %v424 = vld [vmem:[%s417 + $0x18] sm:$0xf]
  %v425 = vld [vmem:[%s417 + $0x1c] sm:$0xf]
  %v426 = vld [vmem:[%s417 + $0x20] sm:$0xf]
  %v427 = vld [vmem:[%s417 + $0x24] sm:$0xf]
  %v428 = vld [vmem:[%s417 + $0x28] sm:$0xf]
  %v429 = vld [vmem:[%s417 + $0x2c] sm:$0xf]
  %v430 = vld [vmem:[%s417 + $0x30] sm:$0xf]
  %v431 = vld [vmem:[%s417 + $0x34] sm:$0xf]
  %v432 = vld [vmem:[%s417 + $0x38] sm:$0xf]
  %v433 = vld [vmem:[%s417 + $0x3c] sm:$0xf]
  %v434 = vld [vmem:[%s417 + $0x40] sm:$0xf]
  %v435 = vld [vmem:[%s417 + $0x44] sm:$0xf]
  %v436 = vld [vmem:[%s417 + $0x48] sm:$0xf]
  %v437 = vld [vmem:[%s417 + $0x4c] sm:$0xf]
  %v438 = vld [vmem:[%s417 + $0x50] sm:$0xf]
  %v439 = vld [vmem:[%s417 + $0x54] sm:$0xf]
  %v440 = vld [vmem:[%s417 + $0x58] sm:$0xf]
  %v441 = vld [vmem:[%s417 + $0x5c] sm:$0xf]
  %vm457 = vcmask 1040384
  %v458 = vrot.slane %v414, 7
  %v459 = vrot.slane %v343, 7
  %v460 = vsel %vm457, %v458, %v459
  %v461 = vrot.slane %v310, 7
  %v462 = vrot.slane %v313, 7
  %v463 = vsel %vm457, %v461, %v462
  %v464 = vrot.slane %v346, 7
  %v465 = vsel %vm457, %v459, %v464
  %v466 = vrot.slane %v315, 7
  %v467 = vsel %vm457, %v462, %v466
  %v468 = vrot.slane %v349, 7
  %v469 = vsel %vm457, %v464, %v468
  %v470 = vrot.slane %v317, 7
  %v471 = vsel %vm457, %v466, %v470
  %v472 = vrot.slane %v352, 7
  %v473 = vsel %vm457, %v468, %v472
  %v474 = vrot.slane %v319, 7
  %v475 = vsel %vm457, %v470, %v474
  %v476 = vrot.slane %v355, 7
  %v477 = vsel %vm457, %v472, %v476
  %v478 = vrot.slane %v321, 7
  %v479 = vsel %vm457, %v474, %v478
  %v480 = vrot.slane %v358, 7
  %v481 = vsel %vm457, %v476, %v480
  %v482 = vrot.slane %v323, 7
  %v483 = vsel %vm457, %v478, %v482
  %v484 = vrot.slane %v361, 7
  %v485 = vsel %vm457, %v480, %v484
  %v486 = vrot.slane %v325, 7
  %v487 = vsel %vm457, %v482, %v486
  %v488 = vrot.slane %v364, 7
  %v489 = vsel %vm457, %v484, %v488
  %v490 = vrot.slane %v327, 7
  %v491 = vsel %vm457, %v486, %v490
  %v492 = vrot.slane %v367, 7
  %v493 = vsel %vm457, %v488, %v492
  %v494 = vrot.slane %v329, 7
  %v495 = vsel %vm457, %v490, %v494
  %v496 = vrot.slane %v370, 7
  %v497 = vsel %vm457, %v492, %v496
  %v498 = vrot.slane %v331, 7
  %v499 = vsel %vm457, %v494, %v498
  %v500 = vrot.slane %v373, 7
  %v501 = vsel %vm457, %v496, %v500
  %v502 = vrot.slane %v333, 7
  %v503 = vsel %vm457, %v498, %v502
  %v504 = vrot.slane %v376, 7
  %v505 = vsel %vm457, %v500, %v504
  %v506 = vrot.slane %v335, 7
  %v507 = vsel %vm457, %v502, %v506
  %v508 = vrot.slane %v379, 7
  %v509 = vsel %vm457, %v504, %v508
  %v510 = vrot.slane %v337, 7
  %v511 = vsel %vm457, %v506, %v510
  %v512 = vrot.slane %v416, 7
  %v513 = vsel %vm457, %v508, %v512
  %v514 = vrot.slane %v336, 7
  %v515 = vsel %vm457, %v510, %v514
  %v554 = vunpack.c.l.b16 %v418
  %v555 = vunpack.c.l.b16 %v419
  %v556 = vunpack.c.l.b16 %v420
  %v557 = vunpack.c.l.b16 %v421
  %v558 = vunpack.c.l.b16 %v422
  %v559 = vunpack.c.l.b16 %v423
  %v560 = vunpack.c.l.b16 %v424
  %v561 = vunpack.c.l.b16 %v425
  %v562 = vunpack.c.l.b16 %v426
  %v563 = vunpack.c.l.b16 %v427
  %v564 = vunpack.c.l.b16 %v428
  %v565 = vunpack.c.l.b16 %v429
  %v566 = vunpack.c.l.b16 %v430
  %v567 = vunpack.c.l.b16 %v431
  %v568 = vunpack.c.l.b16 %v432
  %v569 = vunpack.c.l.b16 %v433
  %v570 = vunpack.c.l.b16 %v434
  %v571 = vunpack.c.l.b16 %v435
  %v572 = vunpack.c.l.b16 %v436
  %v573 = vunpack.c.l.b16 %v437
  %v574 = vunpack.c.l.b16 %v438
  %v575 = vunpack.c.l.b16 %v439
  %v576 = vunpack.c.l.b16 %v440
  %v577 = vunpack.c.l.b16 %v441
  %v578 = vpack.c.b16 %v555, %v554
  %v579 = vpack.c.b16 %v557, %v556
  %v580 = vpack.c.b16 %v559, %v558
  %v581 = vpack.c.b16 %v561, %v560
  %v582 = vpack.c.b16 %v563, %v562
  %v583 = vpack.c.b16 %v565, %v564
  %v584 = vpack.c.b16 %v567, %v566
  %v585 = vpack.c.b16 %v569, %v568
  %v586 = vpack.c.b16 %v571, %v570
  %v587 = vpack.c.b16 %v573, %v572
  %v588 = vpack.c.b16 %v575, %v574
  %v589 = vpack.c.b16 %v577, %v576
  %v603 = vsel %vm338, %v463, 0
  %v606 = vsel %vm338, %v467, 0
  %v609 = vsel %vm338, %v471, 0
  %v612 = vsel %vm338, %v475, 0
  %v615 = vsel %vm338, %v479, 0
  %v618 = vsel %vm338, %v483, 0
  %v621 = vsel %vm338, %v487, 0
  %v624 = vsel %vm338, %v491, 0
  %v627 = vsel %vm338, %v495, 0
  %v630 = vsel %vm338, %v499, 0
  %v633 = vsel %vm338, %v503, 0
  %v636 = vsel %vm338, %v507, 0
  %v639 = vsel %vm338, %v511, 0
  %v642 = vsel %vm338, %v515, 0
  %644 = vmatprep.subr.bf16.mxu0 0
  %645 = vmatpush1.bf16.msra.mxu0 %v578
  %646 = vmatprep.subr.bf16.mxu0 0
  %647 = vmatpush1.bf16.msra.mxu0 %v579
  %648 = vmatprep.subr.bf16.mxu0 0
  %649 = vmatpush1.bf16.msra.mxu0 %v580
  %650 = vmatprep.subr.bf16.mxu0 0
  %651 = vmatpush1.bf16.msra.mxu0 %v581
  %652 = vmatprep.subr.bf16.mxu0 0
  %653 = vmatpush1.bf16.msra.mxu0 %v582
  %654 = vmatprep.subr.bf16.mxu0 0
  %655 = vmatpush1.bf16.msra.mxu0 %v583
  %656 = vmatprep.subr.bf16.mxu0 0
  %657 = vmatpush1.bf16.msra.mxu0 %v584
  %658 = vmatprep.subr.bf16.mxu0 0
  %659 = vmatpush1.bf16.msra.mxu0 %v585
  %660 = vmatprep.subr.bf16.mxu0 0
  %661 = vmatpush1.bf16.msra.mxu0 %v586
  %662 = vmatprep.subr.bf16.mxu0 0
  %663 = vmatpush1.bf16.msra.mxu0 %v587
  %664 = vmatprep.subr.bf16.mxu0 0
  %665 = vmatpush1.bf16.msra.mxu0 %v588
  %666 = vmatprep.subr.bf16.mxu0 0
  %667 = vmatpush1.bf16.msra.mxu0 %v589
  %668 = vmatprep.subr.bf16.mxu0 0
  %669 = vmatpush1.bf16.msra.mxu0 0
  %670 = vmatprep.subr.bf16.mxu0 0
  %671 = vmatpush1.bf16.msra.mxu0 0
  %672 = vmatprep.subr.bf16.mxu0 0
  %673 = vmatpush1.bf16.msra.mxu0 0
  %674 = vmatprep.subr.bf16.mxu0 0
  %675 = vmatpush1.bf16.msra.mxu0 0
  %676 = vmatprep.mubr.bf16.mxu0 %v603
  %677 = vmatmul.mubr.bf16.gmra.mrb[0].mxu0 %v460
  %v678 = vpop.f32.mrb[0].mxu0
  %v679 = vadd.f32 0.0, %v678
  %v680 = vpop.f32.mrb[0].mxu0
  %v681 = vpop.f32.mrb[0].mxu0
  %v682 = vadd.f32 0.0, %v681
  %v683 = vpop.f32.mrb[0].mxu0
  %684 = vmatprep.mubr.bf16.mxu0 %v606
  %685 = vmatmul.mubr.bf16.gmra.mrb[0].mxu0 %v465
  %v686 = vpop.f32.mrb[0].mxu0
  %v687 = vadd.f32 0.0, %v686
  %v688 = vpop.f32.mrb[0].mxu0
  %v689 = vpop.f32.mrb[0].mxu0
  %v690 = vadd.f32 0.0, %v689
  %v691 = vpop.f32.mrb[0].mxu0
  %692 = vmatprep.mubr.bf16.mxu0 %v609
  %693 = vmatmul.mubr.bf16.gmra.mrb[0].mxu0 %v469
  %v694 = vpop.f32.mrb[0].mxu0
  %v695 = vadd.f32 0.0, %v694
  %v696 = vpop.f32.mrb[0].mxu0
  %v697 = vpop.f32.mrb[0].mxu0
  %v698 = vadd.f32 0.0, %v697
  %v699 = vpop.f32.mrb[0].mxu0
  %700 = vmatprep.mubr.bf16.mxu0 %v612
  %701 = vmatmul.mubr.bf16.gmra.mrb[0].mxu0 %v473
  %v702 = vpop.f32.mrb[0].mxu0
  %v703 = vadd.f32 0.0, %v702
  %v704 = vpop.f32.mrb[0].mxu0
  %v705 = vpop.f32.mrb[0].mxu0
  %v706 = vadd.f32 0.0, %v705
  %v707 = vpop.f32.mrb[0].mxu0
  %708 = vmatprep.mubr.bf16.mxu0 %v615
  %709 = vmatmul.mubr.bf16.gmra.mrb[0].mxu0 %v477
  %v710 = vpop.f32.mrb[0].mxu0
  %v711 = vadd.f32 0.0, %v710
  %v712 = vpop.f32.mrb[0].mxu0
  %v713 = vpop.f32.mrb[0].mxu0
  %v714 = vadd.f32 0.0, %v713
  %v715 = vpop.f32.mrb[0].mxu0
  %716 = vmatprep.mubr.bf16.mxu0 %v618
  %717 = vmatmul.mubr.bf16.gmra.mrb[0].mxu0 %v481
  %v718 = vpop.f32.mrb[0].mxu0
  %v719 = vadd.f32 0.0, %v718
  %v720 = vpop.f32.mrb[0].mxu0
  %v721 = vpop.f32.mrb[0].mxu0
  %v722 = vadd.f32 0.0, %v721
  %v723 = vpop.f32.mrb[0].mxu0
  %724 = vmatprep.mubr.bf16.mxu0 %v621
  %725 = vmatmul.mubr.bf16.gmra.mrb[0].mxu0 %v485
  %v726 = vpop.f32.mrb[0].mxu0
  %v727 = vadd.f32 0.0, %v726
  %v728 = vpop.f32.mrb[0].mxu0
  %v729 = vpop.f32.mrb[0].mxu0
  %v730 = vadd.f32 0.0, %v729
  %v731 = vpop.f32.mrb[0].mxu0
  %732 = vmatprep.mubr.bf16.mxu0 %v624
  %733 = vmatmul.mubr.bf16.gmra.mrb[0].mxu0 %v489
  %v734 = vpop.f32.mrb[0].mxu0
  %v735 = vadd.f32 0.0, %v734
  %v736 = vpop.f32.mrb[0].mxu0
  %v737 = vpop.f32.mrb[0].mxu0
  %v738 = vadd.f32 0.0, %v737
  %v739 = vpop.f32.mrb[0].mxu0
  %740 = vmatprep.mubr.bf16.mxu0 %v627
  %741 = vmatmul.mubr.bf16.gmra.mrb[0].mxu0 %v493
  %v742 = vpop.f32.mrb[0].mxu0
  %v743 = vadd.f32 0.0, %v742
  %v744 = vpop.f32.mrb[0].mxu0
  %v745 = vpop.f32.mrb[0].mxu0
  %v746 = vadd.f32 0.0, %v745
  %v747 = vpop.f32.mrb[0].mxu0
  %748 = vmatprep.mubr.bf16.mxu0 %v630
  %749 = vmatmul.mubr.bf16.gmra.mrb[0].mxu0 %v497
  %v750 = vpop.f32.mrb[0].mxu0
  %v751 = vadd.f32 0.0, %v750
  %v752 = vpop.f32.mrb[0].mxu0
  %v753 = vpop.f32.mrb[0].mxu0
  %v754 = vadd.f32 0.0, %v753
  %v755 = vpop.f32.mrb[0].mxu0
  %756 = vmatprep.mubr.bf16.mxu0 %v633
  %757 = vmatmul.mubr.bf16.gmra.mrb[0].mxu0 %v501
  %v758 = vpop.f32.mrb[0].mxu0
  %v759 = vadd.f32 0.0, %v758
  %v760 = vpop.f32.mrb[0].mxu0
  %v761 = vpop.f32.mrb[0].mxu0
  %v762 = vadd.f32 0.0, %v761
  %v763 = vpop.f32.mrb[0].mxu0
  %764 = vmatprep.mubr.bf16.mxu0 %v636
  %765 = vmatmul.mubr.bf16.gmra.mrb[0].mxu0 %v505
  %v766 = vpop.f32.mrb[0].mxu0
  %v767 = vadd.f32 0.0, %v766
  %v768 = vpop.f32.mrb[0].mxu0
  %v769 = vpop.f32.mrb[0].mxu0
  %v770 = vadd.f32 0.0, %v769
  %v771 = vpop.f32.mrb[0].mxu0
  %772 = vmatprep.mubr.bf16.mxu0 %v639
  %773 = vmatmul.mubr.bf16.gmra.mrb[0].mxu0 %v509
  %v774 = vpop.f32.mrb[0].mxu0
  %v775 = vadd.f32 0.0, %v774
  %v776 = vpop.f32.mrb[0].mxu0
  %v777 = vpop.f32.mrb[0].mxu0
  %v778 = vadd.f32 0.0, %v777
  %v779 = vpop.f32.mrb[0].mxu0
  %780 = vmatprep.mubr.bf16.mxu0 %v642
  %781 = vmatmul.mubr.bf16.gmra.mrb[0].mxu0 %v513
  %v782 = vpop.f32.mrb[0].mxu0
  %v783 = vadd.f32 0.0, %v782
  %v784 = vpop.f32.mrb[0].mxu0
  %v785 = vpop.f32.mrb[0].mxu0
  %v786 = vadd.f32 0.0, %v785
  %v787 = vpop.f32.mrb[0].mxu0
  %788 = vdwg.mxu0
  %v813 = vunpack.c.l.b16 %v381
  %v814 = vunpack.c.l.b16 %v382
  %v815 = vunpack.c.l.b16 %v383
  %v816 = vunpack.c.l.b16 %v384
  %v817 = vunpack.c.l.b16 %v385
  %v818 = vunpack.c.l.b16 %v386
  %v819 = vunpack.c.l.b16 %v387
  %v820 = vunpack.c.l.b16 %v388
  %v821 = vunpack.c.l.b16 %v389
  %v822 = vunpack.c.l.b16 %v390
  %v823 = vunpack.c.l.b16 %v391
  %v824 = vunpack.c.l.b16 %v392
  %v825 = vunpack.c.l.b16 %v393
  %v826 = vunpack.c.l.b16 %v394
  %v827 = vunpack.c.l.b16 %v395
  %v828 = vunpack.c.l.b16 %v396
  %v829 = vunpack.c.l.b16 %v397
  %v830 = vunpack.c.l.b16 %v398
  %v831 = vunpack.c.l.b16 %v399
  %v832 = vunpack.c.l.b16 %v400
  %v833 = vunpack.c.l.b16 %v401
  %v834 = vunpack.c.l.b16 %v402
  %v835 = vunpack.c.l.b16 %v403
  %v836 = vunpack.c.l.b16 %v404
  %v837 = vpack.c.b16 %v814, %v813
  %v838 = vpack.c.b16 %v816, %v815
  %v839 = vpack.c.b16 %v818, %v817
  %v840 = vpack.c.b16 %v820, %v819
  %v841 = vpack.c.b16 %v822, %v821
  %v842 = vpack.c.b16 %v824, %v823
  %v843 = vpack.c.b16 %v826, %v825
  %v844 = vpack.c.b16 %v828, %v827
  %v845 = vpack.c.b16 %v830, %v829
  %v846 = vpack.c.b16 %v832, %v831
  %v847 = vpack.c.b16 %v834, %v833
  %v848 = vpack.c.b16 %v836, %v835
  %v862 = vsel %vm338, %v311, 0
  %v865 = vsel %vm338, %v313, 0
  %v868 = vsel %vm338, %v315, 0
  %v871 = vsel %vm338, %v317, 0
  %v874 = vsel %vm338, %v319, 0
  %v877 = vsel %vm338, %v321, 0
  %v880 = vsel %vm338, %v323, 0
  %v883 = vsel %vm338, %v325, 0
  %v886 = vsel %vm338, %v327, 0
  %v889 = vsel %vm338, %v329, 0
  %v892 = vsel %vm338, %v331, 0
  %v895 = vsel %vm338, %v333, 0
  %v898 = vsel %vm338, %v335, 0
  %v901 = vsel %vm338, %v337, 0
  %903 = vmatprep.subr.bf16.mxu0 0
  %904 = vmatpush1.bf16.msra.mxu0 %v837
  %905 = vmatprep.subr.bf16.mxu0 0
  %906 = vmatpush1.bf16.msra.mxu0 %v838
  %907 = vmatprep.subr.bf16.mxu0 0
  %908 = vmatpush1.bf16.msra.mxu0 %v839
  %909 = vmatprep.subr.bf16.mxu0 0
  %910 = vmatpush1.bf16.msra.mxu0 %v840
  %911 = vmatprep.subr.bf16.mxu0 0
  %912 = vmatpush1.bf16.msra.mxu0 %v841
  %913 = vmatprep.subr.bf16.mxu0 0
  %914 = vmatpush1.bf16.msra.mxu0 %v842
  %915 = vmatprep.subr.bf16.mxu0 0
  %916 = vmatpush1.bf16.msra.mxu0 %v843
  %917 = vmatprep.subr.bf16.mxu0 0
  %918 = vmatpush1.bf16.msra.mxu0 %v844
  %919 = vmatprep.subr.bf16.mxu0 0
  %920 = vmatpush1.bf16.msra.mxu0 %v845
  %921 = vmatprep.subr.bf16.mxu0 0
  %922 = vmatpush1.bf16.msra.mxu0 %v846
  %923 = vmatprep.subr.bf16.mxu0 0
  %924 = vmatpush1.bf16.msra.mxu0 %v847
  %925 = vmatprep.subr.bf16.mxu0 0
  %926 = vmatpush1.bf16.msra.mxu0 %v848
  %927 = vmatprep.subr.bf16.mxu0 0
  %928 = vmatpush1.bf16.msra.mxu0 0
  %929 = vmatprep.subr.bf16.mxu0 0
  %930 = vmatpush1.bf16.msra.mxu0 0
  %931 = vmatprep.subr.bf16.mxu0 0
  %932 = vmatpush1.bf16.msra.mxu0 0
  %933 = vmatprep.subr.bf16.mxu0 0
  %934 = vmatpush1.bf16.msra.mxu0 0
  %935 = vmatprep.mubr.bf16.mxu0 %v862
  %936 = vmatmul.mubr.bf16.gmra.mrb[0].mxu0 %v340
  %v937 = vpop.f32.mrb[0].mxu0
  %v938 = vadd.f32 %v679, %v937
  %v939 = vpop.f32.mrb[0].mxu0
  %v940 = vpop.f32.mrb[0].mxu0
  %v941 = vadd.f32 %v682, %v940
  %v942 = vpop.f32.mrb[0].mxu0
  %943 = vmatprep.mubr.bf16.mxu0 %v865
  %944 = vmatmul.mubr.bf16.gmra.mrb[0].mxu0 %v343
  %v945 = vpop.f32.mrb[0].mxu0
  %v946 = vadd.f32 %v687, %v945
  %v947 = vpop.f32.mrb[0].mxu0
  %v948 = vpop.f32.mrb[0].mxu0
  %v949 = vadd.f32 %v690, %v948
  %v950 = vpop.f32.mrb[0].mxu0
  %951 = vmatprep.mubr.bf16.mxu0 %v868
  %952 = vmatmul.mubr.bf16.gmra.mrb[0].mxu0 %v346
  %v953 = vpop.f32.mrb[0].mxu0
  %v954 = vadd.f32 %v695, %v953
  %v955 = vpop.f32.mrb[0].mxu0
  %v956 = vpop.f32.mrb[0].mxu0
  %v957 = vadd.f32 %v698, %v956
  %v958 = vpop.f32.mrb[0].mxu0
  %959 = vmatprep.mubr.bf16.mxu0 %v871
  %960 = vmatmul.mubr.bf16.gmra.mrb[0].mxu0 %v349
  %v961 = vpop.f32.mrb[0].mxu0
  %v962 = vadd.f32 %v703, %v961
  %v963 = vpop.f32.mrb[0].mxu0
  %v964 = vpop.f32.mrb[0].mxu0
  %v965 = vadd.f32 %v706, %v964
  %v966 = vpop.f32.mrb[0].mxu0
  %967 = vmatprep.mubr.bf16.mxu0 %v874
  %968 = vmatmul.mubr.bf16.gmra.mrb[0].mxu0 %v352
  %v969 = vpop.f32.mrb[0].mxu0
  %v970 = vadd.f32 %v711, %v969
  %v971 = vpop.f32.mrb[0].mxu0
  %v972 = vpop.f32.mrb[0].mxu0
  %v973 = vadd.f32 %v714, %v972
  %v974 = vpop.f32.mrb[0].mxu0
  %975 = vmatprep.mubr.bf16.mxu0 %v877
  %976 = vmatmul.mubr.bf16.gmra.mrb[0].mxu0 %v355
  %v977 = vpop.f32.mrb[0].mxu0
  %v978 = vadd.f32 %v719, %v977
  %v979 = vpop.f32.mrb[0].mxu0
  %v980 = vpop.f32.mrb[0].mxu0
  %v981 = vadd.f32 %v722, %v980
  %v982 = vpop.f32.mrb[0].mxu0
  %983 = vmatprep.mubr.bf16.mxu0 %v880
  %984 = vmatmul.mubr.bf16.gmra.mrb[0].mxu0 %v358
  %v985 = vpop.f32.mrb[0].mxu0
  %v986 = vadd.f32 %v727, %v985
  %v987 = vpop.f32.mrb[0].mxu0
  %v988 = vpop.f32.mrb[0].mxu0
  %v989 = vadd.f32 %v730, %v988
  %v990 = vpop.f32.mrb[0].mxu0
  %991 = vmatprep.mubr.bf16.mxu0 %v883
  %992 = vmatmul.mubr.bf16.gmra.mrb[0].mxu0 %v361
  %v993 = vpop.f32.mrb[0].mxu0
  %v994 = vadd.f32 %v735, %v993
  %v995 = vpop.f32.mrb[0].mxu0
  %v996 = vpop.f32.mrb[0].mxu0
  %v997 = vadd.f32 %v738, %v996
  %v998 = vpop.f32.mrb[0].mxu0
  %999 = vmatprep.mubr.bf16.mxu0 %v886
  %1000 = vmatmul.mubr.bf16.gmra.mrb[0].mxu0 %v364
  %v1001 = vpop.f32.mrb[0].mxu0
  %v1002 = vadd.f32 %v743, %v1001
  %v1003 = vpop.f32.mrb[0].mxu0
  %v1004 = vpop.f32.mrb[0].mxu0
  %v1005 = vadd.f32 %v746, %v1004
  %v1006 = vpop.f32.mrb[0].mxu0
  %1007 = vmatprep.mubr.bf16.mxu0 %v889
  %1008 = vmatmul.mubr.bf16.gmra.mrb[0].mxu0 %v367
  %v1009 = vpop.f32.mrb[0].mxu0
  %v1010 = vadd.f32 %v751, %v1009
  %v1011 = vpop.f32.mrb[0].mxu0
  %v1012 = vpop.f32.mrb[0].mxu0
  %v1013 = vadd.f32 %v754, %v1012
  %v1014 = vpop.f32.mrb[0].mxu0
  %1015 = vmatprep.mubr.bf16.mxu0 %v892
  %1016 = vmatmul.mubr.bf16.gmra.mrb[0].mxu0 %v370
  %v1017 = vpop.f32.mrb[0].mxu0
  %v1018 = vadd.f32 %v759, %v1017
  %v1019 = vpop.f32.mrb[0].mxu0
  %v1020 = vpop.f32.mrb[0].mxu0
  %v1021 = vadd.f32 %v762, %v1020
  %v1022 = vpop.f32.mrb[0].mxu0
  %1023 = vmatprep.mubr.bf16.mxu0 %v895
  %1024 = vmatmul.mubr.bf16.gmra.mrb[0].mxu0 %v373
  %v1025 = vpop.f32.mrb[0].mxu0
  %v1026 = vadd.f32 %v767, %v1025
  %v1027 = vpop.f32.mrb[0].mxu0
  %v1028 = vpop.f32.mrb[0].mxu0
  %v1029 = vadd.f32 %v770, %v1028
  %v1030 = vpop.f32.mrb[0].mxu0
  %1031 = vmatprep.mubr.bf16.mxu0 %v898
  %1032 = vmatmul.mubr.bf16.gmra.mrb[0].mxu0 %v376
  %v1033 = vpop.f32.mrb[0].mxu0
  %v1034 = vadd.f32 %v775, %v1033
  %v1035 = vpop.f32.mrb[0].mxu0
  %v1036 = vpop.f32.mrb[0].mxu0
  %v1037 = vadd.f32 %v778, %v1036
  %v1038 = vpop.f32.mrb[0].mxu0
  %1039 = vmatprep.mubr.bf16.mxu0 %v901
  %1040 = vmatmul.mubr.bf16.gmra.mrb[0].mxu0 %v379
  %v1041 = vpop.f32.mrb[0].mxu0
  %v1042 = vadd.f32 %v783, %v1041
  %v1043 = vpop.f32.mrb[0].mxu0
  %v1044 = vpop.f32.mrb[0].mxu0
  %v1045 = vadd.f32 %v786, %v1044
  %v1046 = vpop.f32.mrb[0].mxu0
  %1047 = vdwg.mxu0
  %v1049 = vshll.u32 %v162, 16
  %v1051 = vrot.slane %v1049, 1
  %v1052 = vsel %vm163, %v408, %v1051
  %v1053 = vshrl.u32 %v162, 16
  %v1055 = vor.u32 %v1053, %v1051
  %1056 = vrot.lane.b32.xlu0 %v1052, 64
  %v1057 = vpop.permute.xlu0 %1056
  %1058 = vrot.lane.b32.xlu0 %v1055, 64
  %v1059 = vpop.permute.xlu0 %1058
  %v1060 = vrot.slane %v162, 1
  %v1061 = vsel %vm308, %v336, %v1060
  %v1063 = vsel %vm338, %v161, %v1057
  %v1065 = vsel %vm338, %v162, %v1059
  %s1066 = scalar_lea.vmem %s2, 192
  %v1067 = vld [vmem:[%s1066] sm:$0xf]
  %v1068 = vld [vmem:[%s1066 + $0x4] sm:$0xf]
  %v1069 = vld [vmem:[%s1066 + $0x8] sm:$0xf]
  %v1070 = vld [vmem:[%s1066 + $0xc] sm:$0xf]
  %v1071 = vld [vmem:[%s1066 + $0x10] sm:$0xf]
  %v1072 = vld [vmem:[%s1066 + $0x14] sm:$0xf]
  %v1073 = vld [vmem:[%s1066 + $0x18] sm:$0xf]
  %v1074 = vld [vmem:[%s1066 + $0x1c] sm:$0xf]
  %v1075 = vld [vmem:[%s1066 + $0x20] sm:$0xf]
  %v1076 = vld [vmem:[%s1066 + $0x24] sm:$0xf]
  %v1077 = vld [vmem:[%s1066 + $0x28] sm:$0xf]
  %v1078 = vld [vmem:[%s1066 + $0x2c] sm:$0xf]
  %v1079 = vld [vmem:[%s1066 + $0x30] sm:$0xf]
  %v1080 = vld [vmem:[%s1066 + $0x34] sm:$0xf]
  %v1081 = vld [vmem:[%s1066 + $0x38] sm:$0xf]
  %v1082 = vld [vmem:[%s1066 + $0x3c] sm:$0xf]
  %v1083 = vld [vmem:[%s1066 + $0x40] sm:$0xf]
  %v1084 = vld [vmem:[%s1066 + $0x44] sm:$0xf]
  %v1085 = vld [vmem:[%s1066 + $0x48] sm:$0xf]
  %v1086 = vld [vmem:[%s1066 + $0x4c] sm:$0xf]
  %v1087 = vld [vmem:[%s1066 + $0x50] sm:$0xf]
  %v1088 = vld [vmem:[%s1066 + $0x54] sm:$0xf]
  %v1089 = vld [vmem:[%s1066 + $0x58] sm:$0xf]
  %v1090 = vld [vmem:[%s1066 + $0x5c] sm:$0xf]
  %vm1093 = vcmask 1041408
  %v1094 = vrot.slane %v343, 6
  %v1095 = vrot.slane %v346, 6
  %v1096 = vsel %vm1093, %v1094, %v1095
  %v1097 = vrot.slane %v313, 6
  %v1098 = vrot.slane %v315, 6
  %v1099 = vsel %vm1093, %v1097, %v1098
  %v1100 = vrot.slane %v349, 6
  %v1101 = vsel %vm1093, %v1095, %v1100
  %v1102 = vrot.slane %v317, 6
  %v1103 = vsel %vm1093, %v1098, %v1102
  %v1104 = vrot.slane %v352, 6
  %v1105 = vsel %vm1093, %v1100, %v1104
  %v1106 = vrot.slane %v319, 6
  %v1107 = vsel %vm1093, %v1102, %v1106
  %v1108 = vrot.slane %v355, 6
  %v1109 = vsel %vm1093, %v1104, %v1108
  %v1110 = vrot.slane %v321, 6
  %v1111 = vsel %vm1093, %v1106, %v1110
  %v1112 = vrot.slane %v358, 6
  %v1113 = vsel %vm1093, %v1108, %v1112
  %v1114 = vrot.slane %v323, 6
  %v1115 = vsel %vm1093, %v1110, %v1114
  %v1116 = vrot.slane %v361, 6
  %v1117 = vsel %vm1093, %v1112, %v1116
  %v1118 = vrot.slane %v325, 6
  %v1119 = vsel %vm1093, %v1114, %v1118
  %v1120 = vrot.slane %v364, 6
  %v1121 = vsel %vm1093, %v1116, %v1120
  %v1122 = vrot.slane %v327, 6
  %v1123 = vsel %vm1093, %v1118, %v1122
  %v1124 = vrot.slane %v367, 6
  %v1125 = vsel %vm1093, %v1120, %v1124
  %v1126 = vrot.slane %v329, 6
  %v1127 = vsel %vm1093, %v1122, %v1126
  %v1128 = vrot.slane %v370, 6
  %v1129 = vsel %vm1093, %v1124, %v1128
  %v1130 = vrot.slane %v331, 6
  %v1131 = vsel %vm1093, %v1126, %v1130
  %v1132 = vrot.slane %v373, 6
  %v1133 = vsel %vm1093, %v1128, %v1132
  %v1134 = vrot.slane %v333, 6
  %v1135 = vsel %vm1093, %v1130, %v1134
  %v1136 = vrot.slane %v376, 6
  %v1137 = vsel %vm1093, %v1132, %v1136
  %v1138 = vrot.slane %v335, 6
  %v1139 = vsel %vm1093, %v1134, %v1138
  %v1140 = vrot.slane %v379, 6
  %v1141 = vsel %vm1093, %v1136, %v1140
  %v1142 = vrot.slane %v337, 6
  %v1143 = vsel %vm1093, %v1138, %v1142
  %v1144 = vrot.slane %v1063, 6
  %v1145 = vsel %vm1093, %v1140, %v1144
  %v1146 = vrot.slane %v1061, 6
  %v1147 = vsel %vm1093, %v1142, %v1146
  %v1148 = vrot.slane %v1065, 6
  %v1149 = vsel %vm1093, %v1144, %v1148
  %v1150 = vrot.slane %v1060, 6
  %v1151 = vsel %vm1093, %v1146, %v1150
  %v1190 = vunpack.c.l.b16 %v1067
  %v1191 = vunpack.c.l.b16 %v1068
  %v1192 = vunpack.c.l.b16 %v1069
  %v1193 = vunpack.c.l.b16 %v1070
  %v1194 = vunpack.c.l.b16 %v1071
  %v1195 = vunpack.c.l.b16 %v1072
  %v1196 = vunpack.c.l.b16 %v1073
  %v1197 = vunpack.c.l.b16 %v1074
  %v1198 = vunpack.c.l.b16 %v1075
  %v1199 = vunpack.c.l.b16 %v1076
  %v1200 = vunpack.c.l.b16 %v1077
  %v1201 = vunpack.c.l.b16 %v1078
  %v1202 = vunpack.c.l.b16 %v1079
  %v1203 = vunpack.c.l.b16 %v1080
  %v1204 = vunpack.c.l.b16 %v1081
  %v1205 = vunpack.c.l.b16 %v1082
  %v1206 = vunpack.c.l.b16 %v1083
  %v1207 = vunpack.c.l.b16 %v1084
  %v1208 = vunpack.c.l.b16 %v1085
  %v1209 = vunpack.c.l.b16 %v1086
  %v1210 = vunpack.c.l.b16 %v1087
  %v1211 = vunpack.c.l.b16 %v1088
  %v1212 = vunpack.c.l.b16 %v1089
  %v1213 = vunpack.c.l.b16 %v1090
  %v1214 = vpack.c.b16 %v1191, %v1190
  %v1215 = vpack.c.b16 %v1193, %v1192
  %v1216 = vpack.c.b16 %v1195, %v1194
  %v1217 = vpack.c.b16 %v1197, %v1196
  %v1218 = vpack.c.b16 %v1199, %v1198
  %v1219 = vpack.c.b16 %v1201, %v1200
  %v1220 = vpack.c.b16 %v1203, %v1202
  %v1221 = vpack.c.b16 %v1205, %v1204
  %v1222 = vpack.c.b16 %v1207, %v1206
  %v1223 = vpack.c.b16 %v1209, %v1208
  %v1224 = vpack.c.b16 %v1211, %v1210
  %v1225 = vpack.c.b16 %v1213, %v1212
  %v1239 = vsel %vm338, %v1099, 0
  %v1242 = vsel %vm338, %v1103, 0
  %v1245 = vsel %vm338, %v1107, 0
  %v1248 = vsel %vm338, %v1111, 0
  %v1251 = vsel %vm338, %v1115, 0
  %v1254 = vsel %vm338, %v1119, 0
  %v1257 = vsel %vm338, %v1123, 0
  %v1260 = vsel %vm338, %v1127, 0
  %v1263 = vsel %vm338, %v1131, 0
  %v1266 = vsel %vm338, %v1135, 0
  %v1269 = vsel %vm338, %v1139, 0
  %v1272 = vsel %vm338, %v1143, 0
  %v1275 = vsel %vm338, %v1147, 0
  %v1278 = vsel %vm338, %v1151, 0
  %1280 = vmatprep.subr.bf16.mxu0 0
  %1281 = vmatpush1.bf16.msra.mxu0 %v1214
  %1282 = vmatprep.subr.bf16.mxu0 0
  %1283 = vmatpush1.bf16.msra.mxu0 %v1215
  %1284 = vmatprep.subr.bf16.mxu0 0
  %1285 = vmatpush1.bf16.msra.mxu0 %v1216
  %1286 = vmatprep.subr.bf16.mxu0 0
  %1287 = vmatpush1.bf16.msra.mxu0 %v1217
  %1288 = vmatprep.subr.bf16.mxu0 0
  %1289 = vmatpush1.bf16.msra.mxu0 %v1218
  %1290 = vmatprep.subr.bf16.mxu0 0
  %1291 = vmatpush1.bf16.msra.mxu0 %v1219
  %1292 = vmatprep.subr.bf16.mxu0 0
  %1293 = vmatpush1.bf16.msra.mxu0 %v1220
  %1294 = vmatprep.subr.bf16.mxu0 0
  %1295 = vmatpush1.bf16.msra.mxu0 %v1221
  %1296 = vmatprep.subr.bf16.mxu0 0
  %1297 = vmatpush1.bf16.msra.mxu0 %v1222
  %1298 = vmatprep.subr.bf16.mxu0 0
  %1299 = vmatpush1.bf16.msra.mxu0 %v1223
  %1300 = vmatprep.subr.bf16.mxu0 0
  %1301 = vmatpush1.bf16.msra.mxu0 %v1224
  %1302 = vmatprep.subr.bf16.mxu0 0
  %1303 = vmatpush1.bf16.msra.mxu0 %v1225
  %1304 = vmatprep.subr.bf16.mxu0 0
  %1305 = vmatpush1.bf16.msra.mxu0 0
  %1306 = vmatprep.subr.bf16.mxu0 0
  %1307 = vmatpush1.bf16.msra.mxu0 0
  %1308 = vmatprep.subr.bf16.mxu0 0
  %1309 = vmatpush1.bf16.msra.mxu0 0
  %1310 = vmatprep.subr.bf16.mxu0 0
  %1311 = vmatpush1.bf16.msra.mxu0 0
  %1312 = vmatprep.mubr.bf16.mxu0 %v1239
  %1313 = vmatmul.mubr.bf16.gmra.mrb[0].mxu0 %v1096
  %v1314 = vpop.f32.mrb[0].mxu0
  %v1315 = vadd.f32 0.0, %v1314
  %v1316 = vpop.f32.mrb[0].mxu0
  %v1317 = vpop.f32.mrb[0].mxu0
  %v1318 = vadd.f32 0.0, %v1317
  %v1319 = vpop.f32.mrb[0].mxu0
  %1320 = vmatprep.mubr.bf16.mxu0 %v1242
  %1321 = vmatmul.mubr.bf16.gmra.mrb[0].mxu0 %v1101
  %v1322 = vpop.f32.mrb[0].mxu0
  %v1323 = vadd.f32 0.0, %v1322
  %v1324 = vpop.f32.mrb[0].mxu0
  %v1325 = vpop.f32.mrb[0].mxu0
  %v1326 = vadd.f32 0.0, %v1325
  %v1327 = vpop.f32.mrb[0].mxu0
  %1328 = vmatprep.mubr.bf16.mxu0 %v1245
  %1329 = vmatmul.mubr.bf16.gmra.mrb[0].mxu0 %v1105
  %v1330 = vpop.f32.mrb[0].mxu0
  %v1331 = vadd.f32 0.0, %v1330
  %v1332 = vpop.f32.mrb[0].mxu0
  %v1333 = vpop.f32.mrb[0].mxu0
  %v1334 = vadd.f32 0.0, %v1333
  %v1335 = vpop.f32.mrb[0].mxu0
  %1336 = vmatprep.mubr.bf16.mxu0 %v1248
  %1337 = vmatmul.mubr.bf16.gmra.mrb[0].mxu0 %v1109
  %v1338 = vpop.f32.mrb[0].mxu0
  %v1339 = vadd.f32 0.0, %v1338
  %v1340 = vpop.f32.mrb[0].mxu0
  %v1341 = vpop.f32.mrb[0].mxu0
  %v1342 = vadd.f32 0.0, %v1341
  %v1343 = vpop.f32.mrb[0].mxu0
  %1344 = vmatprep.mubr.bf16.mxu0 %v1251
  %1345 = vmatmul.mubr.bf16.gmra.mrb[0].mxu0 %v1113
  %v1346 = vpop.f32.mrb[0].mxu0
  %v1347 = vadd.f32 0.0, %v1346
  %v1348 = vpop.f32.mrb[0].mxu0
  %v1349 = vpop.f32.mrb[0].mxu0
  %v1350 = vadd.f32 0.0, %v1349
  %v1351 = vpop.f32.mrb[0].mxu0
  %1352 = vmatprep.mubr.bf16.mxu0 %v1254
  %1353 = vmatmul.mubr.bf16.gmra.mrb[0].mxu0 %v1117
  %v1354 = vpop.f32.mrb[0].mxu0
  %v1355 = vadd.f32 0.0, %v1354
  %v1356 = vpop.f32.mrb[0].mxu0
  %v1357 = vpop.f32.mrb[0].mxu0
  %v1358 = vadd.f32 0.0, %v1357
  %v1359 = vpop.f32.mrb[0].mxu0
  %1360 = vmatprep.mubr.bf16.mxu0 %v1257
  %1361 = vmatmul.mubr.bf16.gmra.mrb[0].mxu0 %v1121
  %v1362 = vpop.f32.mrb[0].mxu0
  %v1363 = vadd.f32 0.0, %v1362
  %v1364 = vpop.f32.mrb[0].mxu0
  %v1365 = vpop.f32.mrb[0].mxu0
  %v1366 = vadd.f32 0.0, %v1365
  %v1367 = vpop.f32.mrb[0].mxu0
  %1368 = vmatprep.mubr.bf16.mxu0 %v1260
  %1369 = vmatmul.mubr.bf16.gmra.mrb[0].mxu0 %v1125
  %v1370 = vpop.f32.mrb[0].mxu0
  %v1371 = vadd.f32 0.0, %v1370
  %v1372 = vpop.f32.mrb[0].mxu0
  %v1373 = vpop.f32.mrb[0].mxu0
  %v1374 = vadd.f32 0.0, %v1373
  %v1375 = vpop.f32.mrb[0].mxu0
  %1376 = vmatprep.mubr.bf16.mxu0 %v1263
  %1377 = vmatmul.mubr.bf16.gmra.mrb[0].mxu0 %v1129
  %v1378 = vpop.f32.mrb[0].mxu0
  %v1379 = vadd.f32 0.0, %v1378
  %v1380 = vpop.f32.mrb[0].mxu0
  %v1381 = vpop.f32.mrb[0].mxu0
  %v1382 = vadd.f32 0.0, %v1381
  %v1383 = vpop.f32.mrb[0].mxu0
  %1384 = vmatprep.mubr.bf16.mxu0 %v1266
  %1385 = vmatmul.mubr.bf16.gmra.mrb[0].mxu0 %v1133
  %v1386 = vpop.f32.mrb[0].mxu0
  %v1387 = vadd.f32 0.0, %v1386
  %v1388 = vpop.f32.mrb[0].mxu0
  %v1389 = vpop.f32.mrb[0].mxu0
  %v1390 = vadd.f32 0.0, %v1389
  %v1391 = vpop.f32.mrb[0].mxu0
  %1392 = vmatprep.mubr.bf16.mxu0 %v1269
  %1393 = vmatmul.mubr.bf16.gmra.mrb[0].mxu0 %v1137
  %v1394 = vpop.f32.mrb[0].mxu0
  %v1395 = vadd.f32 0.0, %v1394
  %v1396 = vpop.f32.mrb[0].mxu0
  %v1397 = vpop.f32.mrb[0].mxu0
  %v1398 = vadd.f32 0.0, %v1397
  %v1399 = vpop.f32.mrb[0].mxu0
  %1400 = vmatprep.mubr.bf16.mxu0 %v1272
  %1401 = vmatmul.mubr.bf16.gmra.mrb[0].mxu0 %v1141
  %v1402 = vpop.f32.mrb[0].mxu0
  %v1403 = vadd.f32 0.0, %v1402
  %v1404 = vpop.f32.mrb[0].mxu0
  %v1405 = vpop.f32.mrb[0].mxu0
  %v1406 = vadd.f32 0.0, %v1405
  %v1407 = vpop.f32.mrb[0].mxu0
  %1408 = vmatprep.mubr.bf16.mxu0 %v1275
  %1409 = vmatmul.mubr.bf16.gmra.mrb[0].mxu0 %v1145
  %v1410 = vpop.f32.mrb[0].mxu0
  %v1411 = vadd.f32 0.0, %v1410
  %v1412 = vpop.f32.mrb[0].mxu0
  %v1413 = vpop.f32.mrb[0].mxu0
  %v1414 = vadd.f32 0.0, %v1413
  %v1415 = vpop.f32.mrb[0].mxu0
  %1416 = vmatprep.mubr.bf16.mxu0 %v1278
  %1417 = vmatmul.mubr.bf16.gmra.mrb[0].mxu0 %v1149
  %v1418 = vpop.f32.mrb[0].mxu0
  %v1419 = vadd.f32 0.0, %v1418
  %v1420 = vpop.f32.mrb[0].mxu0
  %v1421 = vpop.f32.mrb[0].mxu0
  %v1422 = vadd.f32 0.0, %v1421
  %v1423 = vpop.f32.mrb[0].mxu0
  %1424 = vdwg.mxu0
  %v1425 = vadd.f32 %v938, %v1315
  %v1426 = vadd.f32 %v941, %v1318
  %v1427 = vadd.f32 %v946, %v1323
  %v1428 = vadd.f32 %v949, %v1326
  %v1429 = vadd.f32 %v954, %v1331
  %v1430 = vadd.f32 %v957, %v1334
  %v1431 = vadd.f32 %v962, %v1339
  %v1432 = vadd.f32 %v965, %v1342
  %v1433 = vadd.f32 %v970, %v1347
  %v1434 = vadd.f32 %v973, %v1350
  %v1435 = vadd.f32 %v978, %v1355
  %v1436 = vadd.f32 %v981, %v1358
  %v1437 = vadd.f32 %v986, %v1363
  %v1438 = vadd.f32 %v989, %v1366
  %v1439 = vadd.f32 %v994, %v1371
  %v1440 = vadd.f32 %v997, %v1374
  %v1441 = vadd.f32 %v1002, %v1379
  %v1442 = vadd.f32 %v1005, %v1382
  %v1443 = vadd.f32 %v1010, %v1387
  %v1444 = vadd.f32 %v1013, %v1390
  %v1445 = vadd.f32 %v1018, %v1395
  %v1446 = vadd.f32 %v1021, %v1398
  %v1447 = vadd.f32 %v1026, %v1403
  %v1448 = vadd.f32 %v1029, %v1406
  %v1449 = vadd.f32 %v1034, %v1411
  %v1450 = vadd.f32 %v1037, %v1414
  %v1451 = vadd.f32 %v1042, %v1419
  %v1452 = vadd.f32 %v1045, %v1422
  %v1453 = vld [vmem:[%s3] sm:$0x1]
  %v1455 = vlaneseq
  %v1456 = vshrl.u32 %v1455, 7
  %v1457 = vsub.s32 0, %v1456
  %v1458 = vrot.slane %v1453, %v1457
  %v1460 = vmul.f32 %v1425, %v1458
  %v1461 = vmul.f32 %v1426, %v1458
  %v1462 = vmul.f32 %v1427, %v1458
  %v1463 = vmul.f32 %v1428, %v1458
  %v1464 = vmul.f32 %v1429, %v1458
  %v1465 = vmul.f32 %v1430, %v1458
  %v1466 = vmul.f32 %v1431, %v1458
  %v1467 = vmul.f32 %v1432, %v1458
  %v1468 = vmul.f32 %v1433, %v1458
  %v1469 = vmul.f32 %v1434, %v1458
  %v1470 = vmul.f32 %v1435, %v1458
  %v1471 = vmul.f32 %v1436, %v1458
  %v1472 = vmul.f32 %v1437, %v1458
  %v1473 = vmul.f32 %v1438, %v1458
  %v1474 = vmul.f32 %v1439, %v1458
  %v1475 = vmul.f32 %v1440, %v1458
  %v1476 = vmul.f32 %v1441, %v1458
  %v1477 = vmul.f32 %v1442, %v1458
  %v1478 = vmul.f32 %v1443, %v1458
  %v1479 = vmul.f32 %v1444, %v1458
  %v1480 = vmul.f32 %v1445, %v1458
  %v1481 = vmul.f32 %v1446, %v1458
  %v1482 = vmul.f32 %v1447, %v1458
  %v1483 = vmul.f32 %v1448, %v1458
  %v1484 = vmul.f32 %v1449, %v1458
  %v1485 = vmul.f32 %v1450, %v1458
  %v1486 = vmul.f32 %v1451, %v1458
  %v1487 = vmul.f32 %v1452, %v1458
  %v1488 = vld [vmem:[%s4] sm:$0x1]
  %v1490 = vlaneseq
  %v1491 = vshrl.u32 %v1490, 7
  %v1492 = vsub.s32 0, %v1491
  %v1493 = vrot.slane %v1488, %v1492
  %v1495 = vadd.f32 %v1460, %v1493
  %v1496 = vadd.f32 %v1461, %v1493
  %v1497 = vadd.f32 %v1462, %v1493
  %v1498 = vadd.f32 %v1463, %v1493
  %v1499 = vadd.f32 %v1464, %v1493
  %v1500 = vadd.f32 %v1465, %v1493
  %v1501 = vadd.f32 %v1466, %v1493
  %v1502 = vadd.f32 %v1467, %v1493
  %v1503 = vadd.f32 %v1468, %v1493
  %v1504 = vadd.f32 %v1469, %v1493
  %v1505 = vadd.f32 %v1470, %v1493
  %v1506 = vadd.f32 %v1471, %v1493
  %v1507 = vadd.f32 %v1472, %v1493
  %v1508 = vadd.f32 %v1473, %v1493
  %v1509 = vadd.f32 %v1474, %v1493
  %v1510 = vadd.f32 %v1475, %v1493
  %v1511 = vadd.f32 %v1476, %v1493
  %v1512 = vadd.f32 %v1477, %v1493
  %v1513 = vadd.f32 %v1478, %v1493
  %v1514 = vadd.f32 %v1479, %v1493
  %v1515 = vadd.f32 %v1480, %v1493
  %v1516 = vadd.f32 %v1481, %v1493
  %v1517 = vadd.f32 %v1482, %v1493
  %v1518 = vadd.f32 %v1483, %v1493
  %v1519 = vadd.f32 %v1484, %v1493
  %v1520 = vadd.f32 %v1485, %v1493
  %v1521 = vadd.f32 %v1486, %v1493
  %v1522 = vadd.f32 %v1487, %v1493
  %v1523 = vld [vmem:[%s5] sm:$0xf]
  %v1524 = vld [vmem:[%s5 + $0x4] sm:$0xf]
  %v1525 = vld [vmem:[%s5 + $0x8] sm:$0xf]
  %v1526 = vld [vmem:[%s5 + $0xc] sm:$0xf]
  %v1527 = vld [vmem:[%s5 + $0x10] sm:$0xf]
  %v1528 = vld [vmem:[%s5 + $0x14] sm:$0xf]
  %v1529 = vld [vmem:[%s5 + $0x18] sm:$0xf]
  %v1530 = vld [vmem:[%s5 + $0x1c] sm:$0xf]
  %v1531 = vld [vmem:[%s5 + $0x20] sm:$0xf]
  %v1532 = vld [vmem:[%s5 + $0x24] sm:$0xf]
  %v1533 = vld [vmem:[%s5 + $0x28] sm:$0xf]
  %v1534 = vld [vmem:[%s5 + $0x2c] sm:$0xf]
  %v1535 = vld [vmem:[%s5 + $0x30] sm:$0xf]
  %v1536 = vld [vmem:[%s5 + $0x34] sm:$0xf]
  %v1537 = vld [vmem:[%s5 + $0x38] sm:$0xf]
  %v1538 = vld [vmem:[%s5 + $0x3c] sm:$0xf]
  %v1539 = vld [vmem:[%s5 + $0x40] sm:$0xf]
  %v1540 = vld [vmem:[%s5 + $0x44] sm:$0xf]
  %v1541 = vld [vmem:[%s5 + $0x48] sm:$0xf]
  %v1542 = vld [vmem:[%s5 + $0x4c] sm:$0xf]
  %v1543 = vld [vmem:[%s5 + $0x50] sm:$0xf]
  %v1544 = vld [vmem:[%s5 + $0x54] sm:$0xf]
  %v1545 = vld [vmem:[%s5 + $0x58] sm:$0xf]
  %v1546 = vld [vmem:[%s5 + $0x5c] sm:$0xf]
  %v1547 = vld [vmem:[%s5 + $0x60] sm:$0xf]
  %v1548 = vld [vmem:[%s5 + $0x64] sm:$0xf]
  %v1549 = vld [vmem:[%s5 + $0x68] sm:$0xf]
  %v1550 = vld [vmem:[%s5 + $0x6c] sm:$0xf]
  %v1551 = vunpack.c.l.bf16 %v1523
  %v1552 = vunpack.c.l.bf16 %v1524
  %v1553 = vunpack.c.l.bf16 %v1525
  %v1554 = vunpack.c.l.bf16 %v1526
  %v1555 = vunpack.c.l.bf16 %v1527
  %v1556 = vunpack.c.l.bf16 %v1528
  %v1557 = vunpack.c.l.bf16 %v1529
  %v1558 = vunpack.c.l.bf16 %v1530
  %v1559 = vunpack.c.l.bf16 %v1531
  %v1560 = vunpack.c.l.bf16 %v1532
  %v1561 = vunpack.c.l.bf16 %v1533
  %v1562 = vunpack.c.l.bf16 %v1534
  %v1563 = vunpack.c.l.bf16 %v1535
  %v1564 = vunpack.c.l.bf16 %v1536
  %v1565 = vunpack.c.l.bf16 %v1537
  %v1566 = vunpack.c.l.bf16 %v1538
  %v1567 = vunpack.c.l.bf16 %v1539
  %v1568 = vunpack.c.l.bf16 %v1540
  %v1569 = vunpack.c.l.bf16 %v1541
  %v1570 = vunpack.c.l.bf16 %v1542
  %v1571 = vunpack.c.l.bf16 %v1543
  %v1572 = vunpack.c.l.bf16 %v1544
  %v1573 = vunpack.c.l.bf16 %v1545
  %v1574 = vunpack.c.l.bf16 %v1546
  %v1575 = vunpack.c.l.bf16 %v1547
  %v1576 = vunpack.c.l.bf16 %v1548
  %v1577 = vunpack.c.l.bf16 %v1549
  %v1578 = vunpack.c.l.bf16 %v1550
  %v1579 = vadd.f32 %v1495, %v1551
  %v1580 = vadd.f32 %v1496, %v1552
  %v1581 = vadd.f32 %v1497, %v1553
  %v1582 = vadd.f32 %v1498, %v1554
  %v1583 = vadd.f32 %v1499, %v1555
  %v1584 = vadd.f32 %v1500, %v1556
  %v1585 = vadd.f32 %v1501, %v1557
  %v1586 = vadd.f32 %v1502, %v1558
  %v1587 = vadd.f32 %v1503, %v1559
  %v1588 = vadd.f32 %v1504, %v1560
  %v1589 = vadd.f32 %v1505, %v1561
  %v1590 = vadd.f32 %v1506, %v1562
  %v1591 = vadd.f32 %v1507, %v1563
  %v1592 = vadd.f32 %v1508, %v1564
  %v1593 = vadd.f32 %v1509, %v1565
  %v1594 = vadd.f32 %v1510, %v1566
  %v1595 = vadd.f32 %v1511, %v1567
  %v1596 = vadd.f32 %v1512, %v1568
  %v1597 = vadd.f32 %v1513, %v1569
  %v1598 = vadd.f32 %v1514, %v1570
  %v1599 = vadd.f32 %v1515, %v1571
  %v1600 = vadd.f32 %v1516, %v1572
  %v1601 = vadd.f32 %v1517, %v1573
  %v1602 = vadd.f32 %v1518, %v1574
  %v1603 = vadd.f32 %v1519, %v1575
  %v1604 = vadd.f32 %v1520, %v1576
  %v1605 = vadd.f32 %v1521, %v1577
  %v1606 = vadd.f32 %v1522, %v1578
  %v1607 = vmax.f32 %v1579, 0.0
  %v1608 = vmax.f32 %v1580, 0.0
  %v1609 = vmax.f32 %v1581, 0.0
  %v1610 = vmax.f32 %v1582, 0.0
  %v1611 = vmax.f32 %v1583, 0.0
  %v1612 = vmax.f32 %v1584, 0.0
  %v1613 = vmax.f32 %v1585, 0.0
  %v1614 = vmax.f32 %v1586, 0.0
  %v1615 = vmax.f32 %v1587, 0.0
  %v1616 = vmax.f32 %v1588, 0.0
  %v1617 = vmax.f32 %v1589, 0.0
  %v1618 = vmax.f32 %v1590, 0.0
  %v1619 = vmax.f32 %v1591, 0.0
  %v1620 = vmax.f32 %v1592, 0.0
  %v1621 = vmax.f32 %v1593, 0.0
  %v1622 = vmax.f32 %v1594, 0.0
  %v1623 = vmax.f32 %v1595, 0.0
  %v1624 = vmax.f32 %v1596, 0.0
  %v1625 = vmax.f32 %v1597, 0.0
  %v1626 = vmax.f32 %v1598, 0.0
  %v1627 = vmax.f32 %v1599, 0.0
  %v1628 = vmax.f32 %v1600, 0.0
  %v1629 = vmax.f32 %v1601, 0.0
  %v1630 = vmax.f32 %v1602, 0.0
  %v1631 = vmax.f32 %v1603, 0.0
  %v1632 = vmax.f32 %v1604, 0.0
  %v1633 = vmax.f32 %v1605, 0.0
  %v1634 = vmax.f32 %v1606, 0.0
  %v1635 = vpack.c.bf16 %v1608, %v1607
  %v1636 = vpack.c.bf16 %v1610, %v1609
  %v1637 = vpack.c.bf16 %v1612, %v1611
  %v1638 = vpack.c.bf16 %v1614, %v1613
  %v1639 = vpack.c.bf16 %v1616, %v1615
  %v1640 = vpack.c.bf16 %v1618, %v1617
  %v1641 = vpack.c.bf16 %v1620, %v1619
  %v1642 = vpack.c.bf16 %v1622, %v1621
  %v1643 = vpack.c.bf16 %v1624, %v1623
  %v1644 = vpack.c.bf16 %v1626, %v1625
  %v1645 = vpack.c.bf16 %v1628, %v1627
  %v1646 = vpack.c.bf16 %v1630, %v1629
  %v1647 = vpack.c.bf16 %v1632, %v1631
  %v1648 = vpack.c.bf16 %v1634, %v1633
  %v1663 = vunpack.c.l.b16 %v1635
  %v1664 = vunpack.c.h.b16 %v1635
  %v1665 = vunpack.c.l.b16 %v1636
  %v1666 = vunpack.c.h.b16 %v1636
  %v1667 = vunpack.c.l.b16 %v1637
  %v1668 = vunpack.c.h.b16 %v1637
  %v1669 = vunpack.c.l.b16 %v1638
  %v1670 = vunpack.c.h.b16 %v1638
  %v1671 = vunpack.c.l.b16 %v1639
  %v1672 = vunpack.c.h.b16 %v1639
  %v1673 = vunpack.c.l.b16 %v1640
  %v1674 = vunpack.c.h.b16 %v1640
  %v1675 = vunpack.c.l.b16 %v1641
  %v1676 = vunpack.c.h.b16 %v1641
  %v1677 = vunpack.c.l.b16 %v1642
  %v1678 = vunpack.c.h.b16 %v1642
  %v1679 = vunpack.c.l.b16 %v1643
  %v1680 = vunpack.c.h.b16 %v1643
  %v1681 = vunpack.c.l.b16 %v1644
  %v1682 = vunpack.c.h.b16 %v1644
  %v1683 = vunpack.c.l.b16 %v1645
  %v1684 = vunpack.c.h.b16 %v1645
  %v1685 = vunpack.c.l.b16 %v1646
  %v1686 = vunpack.c.h.b16 %v1646
  %v1687 = vunpack.c.l.b16 %v1647
  %v1688 = vunpack.c.h.b16 %v1647
  %v1689 = vunpack.c.l.b16 %v1648
  %v1690 = vunpack.c.h.b16 %v1648
  %v1691 = vpack.c.b16 %v1663, %v1663
  %v1692 = vpack.c.b16 %v1664, %v1664
  %v1693 = vpack.c.b16 %v1665, %v1665
  %v1694 = vpack.c.b16 %v1666, %v1666
  %v1695 = vpack.c.b16 %v1667, %v1667
  %v1696 = vpack.c.b16 %v1668, %v1668
  %v1697 = vpack.c.b16 %v1669, %v1669
  %v1698 = vpack.c.b16 %v1670, %v1670
  %v1699 = vpack.c.b16 %v1671, %v1671
  %v1700 = vpack.c.b16 %v1672, %v1672
  %v1701 = vpack.c.b16 %v1673, %v1673
  %v1702 = vpack.c.b16 %v1674, %v1674
  %v1703 = vpack.c.b16 %v1675, %v1675
  %v1704 = vpack.c.b16 %v1676, %v1676
  %v1705 = vpack.c.b16 %v1677, %v1677
  %v1706 = vpack.c.b16 %v1678, %v1678
  %v1707 = vpack.c.b16 %v1679, %v1679
  %v1708 = vpack.c.b16 %v1680, %v1680
  %v1709 = vpack.c.b16 %v1681, %v1681
  %v1710 = vpack.c.b16 %v1682, %v1682
  %v1711 = vpack.c.b16 %v1683, %v1683
  %v1712 = vpack.c.b16 %v1684, %v1684
  %v1713 = vpack.c.b16 %v1685, %v1685
  %v1714 = vpack.c.b16 %v1686, %v1686
  %v1715 = vpack.c.b16 %v1687, %v1687
  %v1716 = vpack.c.b16 %v1688, %v1688
  %v1717 = vpack.c.b16 %v1689, %v1689
  %v1718 = vpack.c.b16 %v1690, %v1690
  %vm1747 = vcmask 519168
  %1748 = vst.msk [vmem:[%s6] sm:$0xf] %vm1747, %v1691
  %1749 = vst.msk [vmem:[%s6 + $0x4] sm:$0xf] %vm1747, %v1692
  %1750 = vst.msk [vmem:[%s6 + $0x8] sm:$0xf] %vm1747, %v1693
  %1751 = vst.msk [vmem:[%s6 + $0xc] sm:$0xf] %vm1747, %v1694
  %1752 = vst.msk [vmem:[%s6 + $0x10] sm:$0xf] %vm1747, %v1695
  %1753 = vst.msk [vmem:[%s6 + $0x14] sm:$0xf] %vm1747, %v1696
  %1754 = vst.msk [vmem:[%s6 + $0x18] sm:$0xf] %vm1747, %v1697
  %1755 = vst.msk [vmem:[%s6 + $0x1c] sm:$0xf] %vm1747, %v1698
  %1756 = vst.msk [vmem:[%s6 + $0x20] sm:$0xf] %vm1747, %v1699
  %1757 = vst.msk [vmem:[%s6 + $0x24] sm:$0xf] %vm1747, %v1700
  %1758 = vst.msk [vmem:[%s6 + $0x28] sm:$0xf] %vm1747, %v1701
  %1759 = vst.msk [vmem:[%s6 + $0x2c] sm:$0xf] %vm1747, %v1702
  %1760 = vst.msk [vmem:[%s6 + $0x30] sm:$0xf] %vm1747, %v1703
  %1761 = vst.msk [vmem:[%s6 + $0x34] sm:$0xf] %vm1747, %v1704
  %1762 = vst.msk [vmem:[%s6 + $0x38] sm:$0xf] %vm1747, %v1705
  %1763 = vst.msk [vmem:[%s6 + $0x3c] sm:$0xf] %vm1747, %v1706
  %1764 = vst.msk [vmem:[%s6 + $0x40] sm:$0xf] %vm1747, %v1707
  %1765 = vst.msk [vmem:[%s6 + $0x44] sm:$0xf] %vm1747, %v1708
  %1766 = vst.msk [vmem:[%s6 + $0x48] sm:$0xf] %vm1747, %v1709
  %1767 = vst.msk [vmem:[%s6 + $0x4c] sm:$0xf] %vm1747, %v1710
  %1768 = vst.msk [vmem:[%s6 + $0x50] sm:$0xf] %vm1747, %v1711
  %1769 = vst.msk [vmem:[%s6 + $0x54] sm:$0xf] %vm1747, %v1712
  %1770 = vst.msk [vmem:[%s6 + $0x58] sm:$0xf] %vm1747, %v1713
  %1771 = vst.msk [vmem:[%s6 + $0x5c] sm:$0xf] %vm1747, %v1714
  %1772 = vst.msk [vmem:[%s6 + $0x60] sm:$0xf] %vm1747, %v1715
  %1773 = vst.msk [vmem:[%s6 + $0x64] sm:$0xf] %vm1747, %v1716
  %1774 = vst.msk [vmem:[%s6 + $0x68] sm:$0xf] %vm1747, %v1717
  %1775 = vst.msk [vmem:[%s6 + $0x6c] sm:$0xf] %vm1747, %v1718
  // Predicated region
  $region26: #{tpu_custom_call.1} parent=0 // pred_check
    _
  $region27: #{tpu_custom_call.1} parent=0 // pred_check_branch
    %1777 = sbr.rel (0) target = $region29
  $region28: #{tpu_custom_call.1} parent=0 // pred_region
    _
  $region29: #{tpu_custom_call.1} parent=0 // pred_fallthru
    _
  // Predicated region
  $region30: #{tpu_custom_call.1} parent=0 // pred_check
    _
  $region31: #{tpu_custom_call.1} parent=0 // pred_check_branch
    %1779 = sbr.rel (0) target = $region33
  $region32: #{tpu_custom_call.1} parent=0 // pred_region
    _
  $region33: #{tpu_custom_call.1} parent=0 // pred_fallthru
    _

</llo_original>
